<compile_context>
chip_gen: v6e
topology: v6e:2x2x1
jax: 0.10.0
libtpu: 0.0.40
codegen_flags: <defaults>
</compile_context>

<pallas_src>
import jax
import jax.numpy as jnp
from jax import lax
from jax.experimental import pallas as pl
from jax.experimental.pallas import tpu as pltpu

F_PAD = 128  # pad hidden features to a full 128-lane vreg slab


def _processor_kernel(s_ref, d_ref, st_ref, dt_ref, h0_ref, e0_ref,
                      w_node_ref, b_node_ref, w_edge_ref, b_edge_ref,
                      bnh_ref, bne_ref,
                      h_out_ref, e_out_ref):
    f32 = jnp.float32
    bf16 = jnp.bfloat16
    layer = pl.program_id(0)
    F = h_out_ref.shape[-1]

    # Layer 0: load features into the VMEM-resident carry. The output blocks have a
    # constant block index over the layer axis, so they stay in VMEM across layers
    # and are written back to HBM only once, after the last layer.
    @pl.when(layer == 0)
    def _():
        h_out_ref[...] = h0_ref[...]
        e_out_ref[...] = e0_ref[...]

    h = h_out_ref[...]                       # (N, F) f32 carried node state
    e = e_out_ref[...]                       # (E, F) f32 carried edge state

    S = s_ref[...]                           # (E, N) bf16 src one-hot
    D = d_ref[...]                           # (E, N) bf16 dst one-hot
    ST = st_ref[...]                         # (N, E) bf16 (pre-transposed)
    DT = dt_ref[...]                         # (N, E) bf16 (pre-transposed)

    # Fused node linear: one (N,F)x(F,5F) MXU matmul -> [A1 | A2 | B2 | A3 | B3].
    hw = jnp.dot(h.astype(bf16), w_node_ref[...],
                 preferred_element_type=f32) + b_node_ref[...]
    A1h = hw[:, 0 * F:1 * F]
    src_feats = hw[:, 1 * F:3 * F]           # [A2h | B2h]  (N, 2F)
    dst_feats = hw[:, 3 * F:5 * F]           # [A3h | B3h]  (N, 2F)

    # Edge linear.
    B1e = jnp.dot(e.astype(bf16), w_edge_ref[...],
                  preferred_element_type=f32) + b_edge_ref[...]

    # Gather node features onto edges: one wide (E,N)x(N,2F) matmul per side.
    g_src = jnp.dot(S, src_feats.astype(bf16), preferred_element_type=f32)  # (E, 2F)
    g_dst = jnp.dot(D, dst_feats.astype(bf16), preferred_element_type=f32)  # (E, 2F)
    A2h_src, B2h_src = g_src[:, :F], g_src[:, F:]
    A3h_dst, B3h_dst = g_dst[:, :F], g_dst[:, F:]

    e_ji = B1e + B2h_src + B3h_dst           # (E, F) f32
    sigma = jax.nn.sigmoid(e_ji)             # f32 elementwise (v5e: no bf16 VPU/EUP)

    # Fused scatter-sum back to nodes: pre-transposed incidence makes the reduction
    # over edges a plain MXU matmul; numerator & denominator packed in one operand.
    fwd_msg = jnp.concatenate([sigma * A2h_src, sigma], axis=1).astype(bf16)  # (E, 2F)
    bwd_msg = jnp.concatenate([sigma * A3h_dst, sigma], axis=1).astype(bf16)  # (E, 2F)
    fwd = jnp.dot(DT, fwd_msg, preferred_element_type=f32)    # (N, 2F)
    bwd = jnp.dot(ST, bwd_msg, preferred_element_type=f32)    # (N, 2F)
    h_fwd = fwd[:, :F] / (fwd[:, F:] + 1e-6)
    h_bwd = bwd[:, :F] / (bwd[:, F:] + 1e-6)

    h_new = A1h + h_fwd + h_bwd
    e_new = e_ji

    # BatchNorm1d, training-mode batch statistics (biased variance), eps=1e-5.
    def batch_norm(x, p):                    # p: (2, F) = [gamma; beta]
        mean = jnp.mean(x, axis=0, keepdims=True)
        var = jnp.mean((x - mean) * (x - mean), axis=0, keepdims=True)
        return (x - mean) * lax.rsqrt(var + 1e-5) * p[0:1] + p[1:2]

    h_new = jnp.maximum(batch_norm(h_new, bnh_ref[...]), 0.0)
    e_new = jnp.maximum(batch_norm(e_new, bne_ref[...]), 0.0)

    # Residual (dropout=None -> identity); result carried in VMEM to the next layer.
    h_out_ref[...] = h + h_new
    e_out_ref[...] = e + e_new


@jax.jit
def sym_gated_gcn_processor(S, D, h, e, packed):
    """Mirrors: for conv in self.convs: h, e = conv(graph, h, e)."""
    N, F = h.shape
    E = e.shape[0]
    L, Fp, _ = packed["W_edge"].shape

    Sb = S.astype(jnp.bfloat16)
    Db = D.astype(jnp.bfloat16)
    STb = Sb.T                                # pre-transposed incidence for scatters
    DTb = Db.T
    hp = jnp.pad(h.astype(jnp.float32), ((0, 0), (0, Fp - F)))
    ep = jnp.pad(e.astype(jnp.float32), ((0, 0), (0, Fp - F)))

    flops_layer = (2 * N * Fp * 5 * Fp            # fused node linear
                   + 2 * E * Fp * Fp              # edge linear
                   + 2 * 2 * E * N * 2 * Fp       # two fused gathers
                   + 2 * 2 * N * E * 2 * Fp)      # two fused scatters
    bytes_accessed = (4 * E * N * 2                       # S, D, S^T, D^T (bf16), once
                      + 2 * (N + E) * Fp * 4 * 2          # h, e in + out (f32)
                      + L * (6 * Fp * Fp * 2 + 10 * Fp * 4))  # per-layer weights
    cost = pl.CostEstimate(flops=L * flops_layer,
                           transcendentals=L * E * Fp,
                           bytes_accessed=bytes_accessed)

    grid_spec = pltpu.PrefetchScalarGridSpec(
        num_scalar_prefetch=0,
        grid=(L,),
        in_specs=[
            pl.BlockSpec((E, N), lambda l: (0, 0)),                 # S       (resident)
            pl.BlockSpec((E, N), lambda l: (0, 0)),                 # D       (resident)
            pl.BlockSpec((N, E), lambda l: (0, 0)),                 # S^T     (resident)
            pl.BlockSpec((N, E), lambda l: (0, 0)),                 # D^T     (resident)
            pl.BlockSpec((N, Fp), lambda l: (0, 0)),                # h0      (resident)
            pl.BlockSpec((E, Fp), lambda l: (0, 0)),                # e0      (resident)
            pl.BlockSpec((None, Fp, 5 * Fp), lambda l: (l, 0, 0)),  # W_node  (per layer)
            pl.BlockSpec((None, 1, 5 * Fp), lambda l: (l, 0, 0)),   # b_node
            pl.BlockSpec((None, Fp, Fp), lambda l: (l, 0, 0)),      # W_edge
            pl.BlockSpec((None, 1, Fp), lambda l: (l, 0, 0)),       # b_edge
            pl.BlockSpec((None, 2, Fp), lambda l: (l, 0, 0)),       # bn_h [gamma;beta]
            pl.BlockSpec((None, 2, Fp), lambda l: (l, 0, 0)),       # bn_e [gamma;beta]
        ],
        out_specs=(
            pl.BlockSpec((N, Fp), lambda l: (0, 0)),                # h carry (resident)
            pl.BlockSpec((E, Fp), lambda l: (0, 0)),                # e carry (resident)
        ),
    )

    h_out, e_out = pl.pallas_call(
        _processor_kernel,
        out_shape=(jax.ShapeDtypeStruct((N, Fp), jnp.float32),
                   jax.ShapeDtypeStruct((E, Fp), jnp.float32)),
        grid_spec=grid_spec,
        compiler_params=pltpu.CompilerParams(
            dimension_semantics=("arbitrary",),
            vmem_limit_bytes=32 * 1024 * 1024),
        cost_estimate=cost,
    )(Sb, Db, STb, DTb, hp, ep,
      packed["W_node"], packed["b_node"], packed["W_edge"], packed["b_edge"],
      packed["bn_h"], packed["bn_e"])

    return h_out[:, :F], e_out[:, :F]


def init_params(key, num_layers, hidden):
    """nn.Linear-style init (U(-k, k), k=1/sqrt(in)), BatchNorm gamma=1/beta=0."""
    params = []
    k = 1.0 / jnp.sqrt(jnp.float32(hidden))
    for _ in range(num_layers):
        key, k1, k2, k3, k4 = jax.random.split(key, 5)
        params.append({
            # Weights stored pre-transposed: y = x @ W + b, W is (F_in, F_out).
            "WA": jax.random.uniform(k1, (3, hidden, hidden), jnp.float32, -k, k),
            "bA": jax.random.uniform(k2, (3, hidden), jnp.float32, -k, k),
            "WB": jax.random.uniform(k3, (3, hidden, hidden), jnp.float32, -k, k),
            "bB": jax.random.uniform(k4, (3, hidden), jnp.float32, -k, k),
            "bn_h": jnp.stack([jnp.ones(hidden), jnp.zeros(hidden)]).astype(jnp.float32),
            "bn_e": jnp.stack([jnp.ones(hidden), jnp.zeros(hidden)]).astype(jnp.float32),
        })
    return params


def pack_params(params, f_pad=None):
    """Fuse + zero-pad + stack per-layer parameters for the layer-grid kernel."""
    F = params[0]["WA"].shape[-1]
    if f_pad is None:
        f_pad = max(F_PAD, ((F + 127) // 128) * 128)
    pad_w = lambda w: jnp.pad(w, ((0, f_pad - F), (0, f_pad - F)))
    pad_v = lambda v: jnp.pad(v.reshape(1, -1), ((0, 0), (0, f_pad - F)))
    W_node, b_node, W_edge, b_edge, bn_h, bn_e = [], [], [], [], [], []
    for p in params:
        WA, bA, WB, bB = p["WA"], p["bA"], p["WB"], p["bB"]
        # Fused node weight column order: [A1 | A2 | B2 | A3 | B3].
        W_node.append(jnp.concatenate(
            [pad_w(WA[0]), pad_w(WA[1]), pad_w(WB[1]), pad_w(WA[2]), pad_w(WB[2])], axis=1))
        b_node.append(jnp.concatenate(
            [pad_v(bA[0]), pad_v(bA[1]), pad_v(bB[1]), pad_v(bA[2]), pad_v(bB[2])], axis=1))
        W_edge.append(pad_w(WB[0]))
        b_edge.append(pad_v(bB[0]))
        bn_h.append(jnp.pad(p["bn_h"], ((0, 0), (0, f_pad - F))))
        bn_e.append(jnp.pad(p["bn_e"], ((0, 0), (0, f_pad - F))))
    return {
        "W_node": jnp.stack(W_node).astype(jnp.bfloat16),   # (L, Fp, 5Fp)
        "b_node": jnp.stack(b_node),                         # (L, 1, 5Fp) f32
        "W_edge": jnp.stack(W_edge).astype(jnp.bfloat16),    # (L, Fp, Fp)
        "b_edge": jnp.stack(b_edge),                          # (L, 1, Fp)  f32
        "bn_h": jnp.stack(bn_h),                              # (L, 2, Fp)  f32
        "bn_e": jnp.stack(bn_e),                              # (L, 2, Fp)  f32
    }


def _reference(S, D, h, e, params):
    """Pure-JAX f32 reference of the same forward pass (unfused, unpadded)."""
    for p in params:
        WA, bA, WB, bB = p["WA"], p["bA"], p["WB"], p["bB"]
        A1h = h @ WA[0] + bA[0]
        A2h = h @ WA[1] + bA[1]
        A3h = h @ WA[2] + bA[2]
        B1e = e @ WB[0] + bB[0]
        B2h = h @ WB[1] + bB[1]
        B3h = h @ WB[2] + bB[2]
        e_ji = B1e + S @ B2h + D @ B3h
        sigma = jax.nn.sigmoid(e_ji)
        h_fwd = (D.T @ (sigma * (S @ A2h))) / (D.T @ sigma + 1e-6)
        h_bwd = (S.T @ (sigma * (D @ A3h))) / (S.T @ sigma + 1e-6)

        def bn(x, q):
            m = x.mean(0, keepdims=True)
            v = ((x - m) ** 2).mean(0, keepdims=True)
            return (x - m) * lax.rsqrt(v + 1e-5) * q[0] + q[1]

        h = h + jnp.maximum(bn(A1h + h_fwd + h_bwd, p["bn_h"]), 0.0)
        e = e + jnp.maximum(bn(e_ji, p["bn_e"]), 0.0)
    return h, e


if __name__ == "__main__":
    num_layers = 2
    hidden = 32
    num_nodes = 32
    num_edges = 64

    root = jax.random.PRNGKey(0)
    k_s, k_d, k_h, k_e, k_p = jax.random.split(root, 5)

    # Random directed graph (deterministic) as dense one-hot incidence matrices.
    src = jax.random.randint(k_s, (num_edges,), 0, num_nodes)
    dst = jax.random.randint(k_d, (num_edges,), 0, num_nodes)
    S = jax.nn.one_hot(src, num_nodes, dtype=jnp.float32)   # (E, N), S[k, src[k]] = 1
    D = jax.nn.one_hot(dst, num_nodes, dtype=jnp.float32)   # (E, N), D[k, dst[k]] = 1

    h = jax.random.normal(k_h, (num_nodes, hidden), jnp.float32)
    e = jax.random.normal(k_e, (num_edges, hidden), jnp.float32)

    params = init_params(k_p, num_layers, hidden)
    packed = pack_params(params)

    h_out, e_out = sym_gated_gcn_processor(S, D, h, e, packed)
    jax.block_until_ready((h_out, e_out))

    assert h_out.shape == (num_nodes, hidden) and e_out.shape == (num_edges, hidden)
    assert jnp.all(jnp.isfinite(h_out)) and jnp.all(jnp.isfinite(e_out))

    # Loose sanity check vs. f32 reference (kernel uses bf16 MXU operands).
    h_ref, e_ref = _reference(S, D, h, e, params)
    scale = float(jnp.maximum(jnp.max(jnp.abs(h_ref)), jnp.max(jnp.abs(e_ref))))
    err_h = float(jnp.max(jnp.abs(h_out - h_ref)))
    err_e = float(jnp.max(jnp.abs(e_out - e_ref)))
    assert err_h < 0.1 * (scale + 1.0) and err_e < 0.1 * (scale + 1.0), (err_h, err_e, scale)

    print("KERNEL_OK")
</pallas_src>

<mosaic_0001>
module attributes {stable_mosaic.version = 11 : i64} {
  func.func @_processor_kernel(%arg0: i32, %arg1: memref<64x32xbf16, #tpu.memory_space<vmem>>, %arg2: memref<64x32xbf16, #tpu.memory_space<vmem>>, %arg3: memref<32x64xbf16, #tpu.memory_space<vmem>>, %arg4: memref<32x64xbf16, #tpu.memory_space<vmem>>, %arg5: memref<32x128xf32, #tpu.memory_space<vmem>>, %arg6: memref<64x128xf32, #tpu.memory_space<vmem>>, %arg7: memref<1x128x640xbf16, #tpu.memory_space<vmem>>, %arg8: memref<1x1x640xf32, #tpu.memory_space<vmem>>, %arg9: memref<1x128x128xbf16, #tpu.memory_space<vmem>>, %arg10: memref<1x1x128xf32, #tpu.memory_space<vmem>>, %arg11: memref<1x2x128xf32, #tpu.memory_space<vmem>>, %arg12: memref<1x2x128xf32, #tpu.memory_space<vmem>>, %arg13: memref<32x128xf32, #tpu.memory_space<vmem>>, %arg14: memref<64x128xf32, #tpu.memory_space<vmem>>) attributes {dimension_semantics = [#tpu.dimension_semantics<arbitrary>], iteration_bounds = array<i64: 2>, scalar_prefetch = 0 : i64, scratch_operands = 0 : i64, tpu.core_type = #tpu.core_type<tc>, window_params = [{pipeline_mode = #tpu.pipeline_mode<synchronous>, transform_indices = @transform_0, window_bounds = array<i64: 64, 32>}, {pipeline_mode = #tpu.pipeline_mode<synchronous>, transform_indices = @transform_1, window_bounds = array<i64: 64, 32>}, {pipeline_mode = #tpu.pipeline_mode<synchronous>, transform_indices = @transform_2, window_bounds = array<i64: 32, 64>}, {pipeline_mode = #tpu.pipeline_mode<synchronous>, transform_indices = @transform_3, window_bounds = array<i64: 32, 64>}, {pipeline_mode = #tpu.pipeline_mode<synchronous>, transform_indices = @transform_4, window_bounds = array<i64: 32, 128>}, {pipeline_mode = #tpu.pipeline_mode<synchronous>, transform_indices = @transform_5, window_bounds = array<i64: 64, 128>}, {transform_indices = @transform_6, window_bounds = array<i64: 1, 128, 640>}, {transform_indices = @transform_7, window_bounds = array<i64: 1, 1, 640>}, {transform_indices = @transform_8, window_bounds = array<i64: 1, 128, 128>}, {transform_indices = @transform_9, window_bounds = array<i64: 1, 1, 128>}, {transform_indices = @transform_10, window_bounds = array<i64: 1, 2, 128>}, {transform_indices = @transform_11, window_bounds = array<i64: 1, 2, 128>}, {pipeline_mode = #tpu.pipeline_mode<synchronous>, transform_indices = @transform_12, window_bounds = array<i64: 32, 128>}, {pipeline_mode = #tpu.pipeline_mode<synchronous>, transform_indices = @transform_13, window_bounds = array<i64: 64, 128>}]} {
    %c0_i32 = arith.constant 0 : i32
    %0 = arith.cmpi eq, %arg0, %c0_i32 : i32
    %1 = arith.extui %0 : i1 to i32
    %c0_i32_0 = arith.constant 0 : i32
    %2 = arith.cmpi ne, %1, %c0_i32_0 : i32
    scf.if %2 {
      %c0_54 = arith.constant 0 : index
      %c0_55 = arith.constant 0 : index
      %127 = vector.load %arg5[%c0_54, %c0_55] : memref<32x128xf32, #tpu.memory_space<vmem>>, vector<32x128xf32>
      %c0_56 = arith.constant 0 : index
      %c0_57 = arith.constant 0 : index
      %128 = vector.load %arg13[%c0_56, %c0_57] : memref<32x128xf32, #tpu.memory_space<vmem>>, vector<32x128xf32>
      tpu.vector_store %arg13[%c0_56, %c0_57], %127 {strides = array<i32>} : memref<32x128xf32, #tpu.memory_space<vmem>>, vector<32x128xf32>,
      %c0_58 = arith.constant 0 : index
      %c0_59 = arith.constant 0 : index
      %129 = vector.load %arg6[%c0_58, %c0_59] : memref<64x128xf32, #tpu.memory_space<vmem>>, vector<64x128xf32>
      %c0_60 = arith.constant 0 : index
      %c0_61 = arith.constant 0 : index
      %130 = vector.load %arg14[%c0_60, %c0_61] : memref<64x128xf32, #tpu.memory_space<vmem>>, vector<64x128xf32>
      tpu.vector_store %arg14[%c0_60, %c0_61], %129 {strides = array<i32>} : memref<64x128xf32, #tpu.memory_space<vmem>>, vector<64x128xf32>,
    } else {
    }
    %c0 = arith.constant 0 : index
    %c0_1 = arith.constant 0 : index
    %3 = vector.load %arg13[%c0, %c0_1] : memref<32x128xf32, #tpu.memory_space<vmem>>, vector<32x128xf32>
    %c0_2 = arith.constant 0 : index
    %c0_3 = arith.constant 0 : index
    %4 = vector.load %arg14[%c0_2, %c0_3] : memref<64x128xf32, #tpu.memory_space<vmem>>, vector<64x128xf32>
    %c0_4 = arith.constant 0 : index
    %c0_5 = arith.constant 0 : index
    %5 = vector.load %arg1[%c0_4, %c0_5] : memref<64x32xbf16, #tpu.memory_space<vmem>>, vector<64x32xbf16>
    %c0_6 = arith.constant 0 : index
    %c0_7 = arith.constant 0 : index
    %6 = vector.load %arg2[%c0_6, %c0_7] : memref<64x32xbf16, #tpu.memory_space<vmem>>, vector<64x32xbf16>
    %c0_8 = arith.constant 0 : index
    %c0_9 = arith.constant 0 : index
    %7 = vector.load %arg3[%c0_8, %c0_9] : memref<32x64xbf16, #tpu.memory_space<vmem>>, vector<32x64xbf16>
    %c0_10 = arith.constant 0 : index
    %c0_11 = arith.constant 0 : index
    %8 = vector.load %arg4[%c0_10, %c0_11] : memref<32x64xbf16, #tpu.memory_space<vmem>>, vector<32x64xbf16>
    %9 = arith.truncf %3 : vector<32x128xf32> to vector<32x128xbf16>
    %c0_12 = arith.constant 0 : index
    %c0_13 = arith.constant 0 : index
    %c0_14 = arith.constant 0 : index
    %10 = vector.load %arg7[%c0_12, %c0_13, %c0_14] : memref<1x128x640xbf16, #tpu.memory_space<vmem>>, vector<1x128x640xbf16>
    %11 = vector.shape_cast %10 : vector<1x128x640xbf16> to vector<128x640xbf16>
    %cst = arith.constant dense<0.000000e+00> : vector<32x640xf32>
    %12 = tpu.matmul %9, %11, %cst {dimension_numbers = #tpu.dot_dimension_numbers<[1], [0], [0], [1], [0, 0, 1, 1], [], []>} : vector<32x128xbf16>, vector<128x640xbf16>, vector<32x640xf32> -> vector<32x640xf32>
    %c0_15 = arith.constant 0 : index
    %c0_16 = arith.constant 0 : index
    %c0_17 = arith.constant 0 : index
    %13 = vector.load %arg8[%c0_15, %c0_16, %c0_17] : memref<1x1x640xf32, #tpu.memory_space<vmem>>, vector<1x1x640xf32>
    %14 = vector.shape_cast %13 : vector<1x1x640xf32> to vector<1x640xf32>
    %15 = vector.broadcast %14 : vector<1x640xf32> to vector<32x640xf32>
    %16 = arith.addf %12, %15 : vector<32x640xf32>
    %17 = vector.extract_strided_slice %16 {offsets = [0, 0], sizes = [32, 128], strides = [1, 1]} : vector<32x640xf32> to vector<32x128xf32>
    %18 = vector.extract_strided_slice %16 {offsets = [0, 128], sizes = [32, 256], strides = [1, 1]} : vector<32x640xf32> to vector<32x256xf32>
    %19 = vector.extract_strided_slice %16 {offsets = [0, 384], sizes = [32, 256], strides = [1, 1]} : vector<32x640xf32> to vector<32x256xf32>
    %20 = arith.truncf %4 : vector<64x128xf32> to vector<64x128xbf16>
    %c0_18 = arith.constant 0 : index
    %c0_19 = arith.constant 0 : index
    %c0_20 = arith.constant 0 : index
    %21 = vector.load %arg9[%c0_18, %c0_19, %c0_20] : memref<1x128x128xbf16, #tpu.memory_space<vmem>>, vector<1x128x128xbf16>
    %22 = vector.shape_cast %21 : vector<1x128x128xbf16> to vector<128x128xbf16>
    %cst_21 = arith.constant dense<0.000000e+00> : vector<64x128xf32>
    %23 = tpu.matmul %20, %22, %cst_21 {dimension_numbers = #tpu.dot_dimension_numbers<[1], [0], [0], [1], [0, 0, 1, 1], [], []>} : vector<64x128xbf16>, vector<128x128xbf16>, vector<64x128xf32> -> vector<64x128xf32>
    %c0_22 = arith.constant 0 : index
    %c0_23 = arith.constant 0 : index
    %c0_24 = arith.constant 0 : index
    %24 = vector.load %arg10[%c0_22, %c0_23, %c0_24] : memref<1x1x128xf32, #tpu.memory_space<vmem>>, vector<1x1x128xf32>
    %25 = vector.shape_cast %24 : vector<1x1x128xf32> to vector<1x128xf32>
    %26 = vector.broadcast %25 : vector<1x128xf32> to vector<64x128xf32>
    %27 = arith.addf %23, %26 : vector<64x128xf32>
    %28 = arith.truncf %18 : vector<32x256xf32> to vector<32x256xbf16>
    %cst_25 = arith.constant dense<0.000000e+00> : vector<64x256xf32>
    %29 = tpu.matmul %5, %28, %cst_25 {dimension_numbers = #tpu.dot_dimension_numbers<[1], [0], [0], [1], [0, 0, 1, 1], [], []>} : vector<64x32xbf16>, vector<32x256xbf16>, vector<64x256xf32> -> vector<64x256xf32>
    %30 = arith.truncf %19 : vector<32x256xf32> to vector<32x256xbf16>
    %cst_26 = arith.constant dense<0.000000e+00> : vector<64x256xf32>
    %31 = tpu.matmul %6, %30, %cst_26 {dimension_numbers = #tpu.dot_dimension_numbers<[1], [0], [0], [1], [0, 0, 1, 1], [], []>} : vector<64x32xbf16>, vector<32x256xbf16>, vector<64x256xf32> -> vector<64x256xf32>
    %32 = vector.extract_strided_slice %29 {offsets = [0, 0], sizes = [64, 128], strides = [1, 1]} : vector<64x256xf32> to vector<64x128xf32>
    %33 = vector.extract_strided_slice %29 {offsets = [0, 128], sizes = [64, 128], strides = [1, 1]} : vector<64x256xf32> to vector<64x128xf32>
    %34 = vector.extract_strided_slice %31 {offsets = [0, 0], sizes = [64, 128], strides = [1, 1]} : vector<64x256xf32> to vector<64x128xf32>
    %35 = vector.extract_strided_slice %31 {offsets = [0, 128], sizes = [64, 128], strides = [1, 1]} : vector<64x256xf32> to vector<64x128xf32>
    %36 = arith.addf %27, %33 : vector<64x128xf32>
    %37 = arith.addf %36, %35 : vector<64x128xf32>
    %38 = arith.negf %37 : vector<64x128xf32>
    %39 = math.exp %38 : vector<64x128xf32>
    %cst_27 = arith.constant 1.000000e+00 : f32
    %40 = vector.broadcast %cst_27 : f32 to vector<64x128xf32>
    %41 = arith.addf %40, %39 : vector<64x128xf32>
    %42 = arith.divf %40, %41 : vector<64x128xf32>
    %43 = arith.mulf %42, %32 : vector<64x128xf32>
    %44 = tpu.concatenate %43, %42 in 1 : vector<64x128xf32>, vector<64x128xf32> -> vector<64x256xf32>
    %45 = arith.truncf %44 : vector<64x256xf32> to vector<64x256xbf16>
    %46 = arith.mulf %42, %34 : vector<64x128xf32>
    %47 = tpu.concatenate %46, %42 in 1 : vector<64x128xf32>, vector<64x128xf32> -> vector<64x256xf32>
    %48 = arith.truncf %47 : vector<64x256xf32> to vector<64x256xbf16>
    %cst_28 = arith.constant dense<0.000000e+00> : vector<32x256xf32>
    %49 = tpu.matmul %8, %45, %cst_28 {dimension_numbers = #tpu.dot_dimension_numbers<[1], [0], [0], [1], [0, 0, 1, 1], [], []>} : vector<32x64xbf16>, vector<64x256xbf16>, vector<32x256xf32> -> vector<32x256xf32>
    %cst_29 = arith.constant dense<0.000000e+00> : vector<32x256xf32>
    %50 = tpu.matmul %7, %48, %cst_29 {dimension_numbers = #tpu.dot_dimension_numbers<[1], [0], [0], [1], [0, 0, 1, 1], [], []>} : vector<32x64xbf16>, vector<64x256xbf16>, vector<32x256xf32> -> vector<32x256xf32>
    %51 = vector.extract_strided_slice %49 {offsets = [0, 0], sizes = [32, 128], strides = [1, 1]} : vector<32x256xf32> to vector<32x128xf32>
    %52 = vector.extract_strided_slice %49 {offsets = [0, 128], sizes = [32, 128], strides = [1, 1]} : vector<32x256xf32> to vector<32x128xf32>
    %cst_30 = arith.constant 9.99999997E-7 : f32
    %53 = vector.broadcast %cst_30 : f32 to vector<32x128xf32>
    %54 = arith.addf %52, %53 : vector<32x128xf32>
    %55 = arith.divf %51, %54 : vector<32x128xf32>
    %56 = vector.extract_strided_slice %50 {offsets = [0, 0], sizes = [32, 128], strides = [1, 1]} : vector<32x256xf32> to vector<32x128xf32>
    %57 = vector.extract_strided_slice %50 {offsets = [0, 128], sizes = [32, 128], strides = [1, 1]} : vector<32x256xf32> to vector<32x128xf32>
    %cst_31 = arith.constant 9.99999997E-7 : f32
    %58 = vector.broadcast %cst_31 : f32 to vector<32x128xf32>
    %59 = arith.addf %57, %58 : vector<32x128xf32>
    %60 = arith.divf %56, %59 : vector<32x128xf32>
    %61 = arith.addf %17, %55 : vector<32x128xf32>
    %62 = arith.addf %61, %60 : vector<32x128xf32>
    %c0_32 = arith.constant 0 : index
    %c0_33 = arith.constant 0 : index
    %c0_34 = arith.constant 0 : index
    %63 = vector.load %arg11[%c0_32, %c0_33, %c0_34] : memref<1x2x128xf32, #tpu.memory_space<vmem>>, vector<1x2x128xf32>
    %64 = vector.shape_cast %63 : vector<1x2x128xf32> to vector<2x128xf32>
    %cst_35 = arith.constant dense<0.000000e+00> : vector<128xf32>
    %65 = vector.multi_reduction <add>, %62, %cst_35 [0] : vector<32x128xf32> to vector<128xf32>
    %66 = vector.shape_cast %65 : vector<128xf32> to vector<1x128xf32>
    %cst_36 = arith.constant 3.200000e+01 : f32
    %67 = vector.broadcast %cst_36 : f32 to vector<1x128xf32>
    %68 = arith.divf %66, %67 : vector<1x128xf32>
    %69 = vector.broadcast %68 : vector<1x128xf32> to vector<32x128xf32>
    %70 = arith.subf %62, %69 : vector<32x128xf32>
    %71 = vector.broadcast %68 : vector<1x128xf32> to vector<32x128xf32>
    %72 = arith.subf %62, %71 : vector<32x128xf32>
    %73 = arith.mulf %70, %72 : vector<32x128xf32>
    %cst_37 = arith.constant dense<0.000000e+00> : vector<128xf32>
    %74 = vector.multi_reduction <add>, %73, %cst_37 [0] : vector<32x128xf32> to vector<128xf32>
    %75 = vector.shape_cast %74 : vector<128xf32> to vector<1x128xf32>
    %cst_38 = arith.constant 3.200000e+01 : f32
    %76 = vector.broadcast %cst_38 : f32 to vector<1x128xf32>
    %77 = arith.divf %75, %76 : vector<1x128xf32>
    %78 = vector.broadcast %68 : vector<1x128xf32> to vector<32x128xf32>
    %79 = arith.subf %62, %78 : vector<32x128xf32>
    %cst_39 = arith.constant 9.99999974E-6 : f32
    %80 = vector.broadcast %cst_39 : f32 to vector<1x128xf32>
    %81 = arith.addf %77, %80 : vector<1x128xf32>
    %82 = math.rsqrt %81 : vector<1x128xf32>
    %83 = vector.broadcast %82 : vector<1x128xf32> to vector<32x128xf32>
    %84 = arith.mulf %79, %83 : vector<32x128xf32>
    %85 = vector.extract_strided_slice %64 {offsets = [0, 0], sizes = [1, 128], strides = [1, 1]} : vector<2x128xf32> to vector<1x128xf32>
    %86 = vector.broadcast %85 : vector<1x128xf32> to vector<32x128xf32>
    %87 = arith.mulf %84, %86 : vector<32x128xf32>
    %88 = vector.extract_strided_slice %64 {offsets = [1, 0], sizes = [1, 128], strides = [1, 1]} : vector<2x128xf32> to vector<1x128xf32>
    %89 = vector.broadcast %88 : vector<1x128xf32> to vector<32x128xf32>
    %90 = arith.addf %87, %89 : vector<32x128xf32>
    %cst_40 = arith.constant 0.000000e+00 : f32
    %91 = vector.broadcast %cst_40 : f32 to vector<32x128xf32>
    %92 = arith.maximumf %90, %91 : vector<32x128xf32>
    %c0_41 = arith.constant 0 : index
    %c0_42 = arith.constant 0 : index
    %c0_43 = arith.constant 0 : index
    %93 = vector.load %arg12[%c0_41, %c0_42, %c0_43] : memref<1x2x128xf32, #tpu.memory_space<vmem>>, vector<1x2x128xf32>
    %94 = vector.shape_cast %93 : vector<1x2x128xf32> to vector<2x128xf32>
    %cst_44 = arith.constant dense<0.000000e+00> : vector<128xf32>
    %95 = vector.multi_reduction <add>, %37, %cst_44 [0] : vector<64x128xf32> to vector<128xf32>
    %96 = vector.shape_cast %95 : vector<128xf32> to vector<1x128xf32>
    %cst_45 = arith.constant 6.400000e+01 : f32
    %97 = vector.broadcast %cst_45 : f32 to vector<1x128xf32>
    %98 = arith.divf %96, %97 : vector<1x128xf32>
    %99 = vector.broadcast %98 : vector<1x128xf32> to vector<64x128xf32>
    %100 = arith.subf %37, %99 : vector<64x128xf32>
    %101 = vector.broadcast %98 : vector<1x128xf32> to vector<64x128xf32>
    %102 = arith.subf %37, %101 : vector<64x128xf32>
    %103 = arith.mulf %100, %102 : vector<64x128xf32>
    %cst_46 = arith.constant dense<0.000000e+00> : vector<128xf32>
    %104 = vector.multi_reduction <add>, %103, %cst_46 [0] : vector<64x128xf32> to vector<128xf32>
    %105 = vector.shape_cast %104 : vector<128xf32> to vector<1x128xf32>
    %cst_47 = arith.constant 6.400000e+01 : f32
    %106 = vector.broadcast %cst_47 : f32 to vector<1x128xf32>
    %107 = arith.divf %105, %106 : vector<1x128xf32>
    %108 = vector.broadcast %98 : vector<1x128xf32> to vector<64x128xf32>
    %109 = arith.subf %37, %108 : vector<64x128xf32>
    %cst_48 = arith.constant 9.99999974E-6 : f32
    %110 = vector.broadcast %cst_48 : f32 to vector<1x128xf32>
    %111 = arith.addf %107, %110 : vector<1x128xf32>
    %112 = math.rsqrt %111 : vector<1x128xf32>
    %113 = vector.broadcast %112 : vector<1x128xf32> to vector<64x128xf32>
    %114 = arith.mulf %109, %113 : vector<64x128xf32>
    %115 = vector.extract_strided_slice %94 {offsets = [0, 0], sizes = [1, 128], strides = [1, 1]} : vector<2x128xf32> to vector<1x128xf32>
    %116 = vector.broadcast %115 : vector<1x128xf32> to vector<64x128xf32>
    %117 = arith.mulf %114, %116 : vector<64x128xf32>
    %118 = vector.extract_strided_slice %94 {offsets = [1, 0], sizes = [1, 128], strides = [1, 1]} : vector<2x128xf32> to vector<1x128xf32>
    %119 = vector.broadcast %118 : vector<1x128xf32> to vector<64x128xf32>
    %120 = arith.addf %117, %119 : vector<64x128xf32>
    %cst_49 = arith.constant 0.000000e+00 : f32
    %121 = vector.broadcast %cst_49 : f32 to vector<64x128xf32>
    %122 = arith.maximumf %120, %121 : vector<64x128xf32>
    %123 = arith.addf %3, %92 : vector<32x128xf32>
    %c0_50 = arith.constant 0 : index
    %c0_51 = arith.constant 0 : index
    %124 = vector.load %arg13[%c0_50, %c0_51] : memref<32x128xf32, #tpu.memory_space<vmem>>, vector<32x128xf32>
    tpu.vector_store %arg13[%c0_50, %c0_51], %123 {strides = array<i32>} : memref<32x128xf32, #tpu.memory_space<vmem>>, vector<32x128xf32>,
    %125 = arith.addf %4, %122 : vector<64x128xf32>
    %c0_52 = arith.constant 0 : index
    %c0_53 = arith.constant 0 : index
    %126 = vector.load %arg14[%c0_52, %c0_53] : memref<64x128xf32, #tpu.memory_space<vmem>>, vector<64x128xf32>
    tpu.vector_store %arg14[%c0_52, %c0_53], %125 {strides = array<i32>} : memref<64x128xf32, #tpu.memory_space<vmem>>, vector<64x128xf32>,
    return
  }
  func.func @transform_0(%arg0: i32) -> (i32, i32) {
    %c0_i32 = arith.constant 0 : i32
    %c0_i32_0 = arith.constant 0 : i32
    %c0_i32_1 = arith.constant 0 : i32
    return %c0_i32, %c0_i32_0 : i32, i32
  }
  func.func @transform_1(%arg0: i32) -> (i32, i32) {
    %c0_i32 = arith.constant 0 : i32
    %c0_i32_0 = arith.constant 0 : i32
    %c0_i32_1 = arith.constant 0 : i32
    return %c0_i32, %c0_i32_0 : i32, i32
  }
  func.func @transform_2(%arg0: i32) -> (i32, i32) {
    %c0_i32 = arith.constant 0 : i32
    %c0_i32_0 = arith.constant 0 : i32
    %c0_i32_1 = arith.constant 0 : i32
    return %c0_i32, %c0_i32_0 : i32, i32
  }
  func.func @transform_3(%arg0: i32) -> (i32, i32) {
    %c0_i32 = arith.constant 0 : i32
    %c0_i32_0 = arith.constant 0 : i32
    %c0_i32_1 = arith.constant 0 : i32
    return %c0_i32, %c0_i32_0 : i32, i32
  }
  func.func @transform_4(%arg0: i32) -> (i32, i32) {
    %c0_i32 = arith.constant 0 : i32
    %c0_i32_0 = arith.constant 0 : i32
    %c0_i32_1 = arith.constant 0 : i32
    return %c0_i32, %c0_i32_0 : i32, i32
  }
  func.func @transform_5(%arg0: i32) -> (i32, i32) {
    %c0_i32 = arith.constant 0 : i32
    %c0_i32_0 = arith.constant 0 : i32
    %c0_i32_1 = arith.constant 0 : i32
    return %c0_i32, %c0_i32_0 : i32, i32
  }
  func.func @transform_6(%arg0: i32) -> (i32, i32, i32) {
    %c0_i32 = arith.constant 0 : i32
    %c0_i32_0 = arith.constant 0 : i32
    %c0_i32_1 = arith.constant 0 : i32
    return %arg0, %c0_i32, %c0_i32_0 : i32, i32, i32
  }
  func.func @transform_7(%arg0: i32) -> (i32, i32, i32) {
    %c0_i32 = arith.constant 0 : i32
    %c0_i32_0 = arith.constant 0 : i32
    %c0_i32_1 = arith.constant 0 : i32
    return %arg0, %c0_i32, %c0_i32_0 : i32, i32, i32
  }
  func.func @transform_8(%arg0: i32) -> (i32, i32, i32) {
    %c0_i32 = arith.constant 0 : i32
    %c0_i32_0 = arith.constant 0 : i32
    %c0_i32_1 = arith.constant 0 : i32
    return %arg0, %c0_i32, %c0_i32_0 : i32, i32, i32
  }
  func.func @transform_9(%arg0: i32) -> (i32, i32, i32) {
    %c0_i32 = arith.constant 0 : i32
    %c0_i32_0 = arith.constant 0 : i32
    %c0_i32_1 = arith.constant 0 : i32
    return %arg0, %c0_i32, %c0_i32_0 : i32, i32, i32
  }
  func.func @transform_10(%arg0: i32) -> (i32, i32, i32) {
    %c0_i32 = arith.constant 0 : i32
    %c0_i32_0 = arith.constant 0 : i32
    %c0_i32_1 = arith.constant 0 : i32
    return %arg0, %c0_i32, %c0_i32_0 : i32, i32, i32
  }
  func.func @transform_11(%arg0: i32) -> (i32, i32, i32) {
    %c0_i32 = arith.constant 0 : i32
    %c0_i32_0 = arith.constant 0 : i32
    %c0_i32_1 = arith.constant 0 : i32
    return %arg0, %c0_i32, %c0_i32_0 : i32, i32, i32
  }
  func.func @transform_12(%arg0: i32) -> (i32, i32) {
    %c0_i32 = arith.constant 0 : i32
    %c0_i32_0 = arith.constant 0 : i32
    %c0_i32_1 = arith.constant 0 : i32
    return %c0_i32, %c0_i32_0 : i32, i32
  }
  func.func @transform_13(%arg0: i32) -> (i32, i32) {
    %c0_i32 = arith.constant 0 : i32
    %c0_i32_0 = arith.constant 0 : i32
    %c0_i32_1 = arith.constant 0 : i32
    return %c0_i32, %c0_i32_0 : i32, i32
  }
}

</mosaic_0001>

<llo_original>
// kernel: sym_gated_gcn_processor.1
$region0: #{sym_gated_gcn_processor.1}
  #allocation0 [shape = 'u32[]', space=smem, size = 0x4, offset = 0x4, fixed_abs, tag = 'smem constant byte address 0x4 - core index']
  #allocation1 [shape = 'u32[144,128]{1,0:T(1,128)}', space=vmem, size = 0x12000, scoped, tag = 'internal scratch']
  %s0 = inlined_call_operand.vmem [shape: bf16[64,32], index: 0, kind: input, shape index: {}]
  %s1 = inlined_call_operand.vmem [shape: bf16[64,32], index: 1, kind: input, shape index: {}]
  %s2 = inlined_call_operand.vmem [shape: bf16[32,64], index: 2, kind: input, shape index: {}]
  %s3 = inlined_call_operand.vmem [shape: bf16[32,64], index: 3, kind: input, shape index: {}]
  %s4 = inlined_call_operand.vmem [shape: f32[32,128], index: 4, kind: input, shape index: {}]
  %s5 = inlined_call_operand.vmem [shape: f32[64,128], index: 5, kind: input, shape index: {}]
  %s6 = inlined_call_operand.hbm [shape: bf16[2,128,640], index: 6, kind: input, shape index: {}]
  %s7 = inlined_call_operand.vmem [shape: f32[2,1,640], index: 7, kind: input, shape index: {}]
  %s8 = inlined_call_operand.vmem [shape: bf16[2,128,128], index: 8, kind: input, shape index: {}]
  %s9 = inlined_call_operand.vmem [shape: f32[2,1,128], index: 9, kind: input, shape index: {}]
  %s10 = inlined_call_operand.vmem [shape: f32[2,2,128], index: 10, kind: input, shape index: {}]
  %s11 = inlined_call_operand.vmem [shape: f32[2,2,128], index: 11, kind: input, shape index: {}]
  %s12 = inlined_call_operand.hbm [shape: f32[32,128], index: 12, kind: output, shape index: {0}]
  %s13 = inlined_call_operand.vmem [shape: f32[64,128], index: 13, kind: output, shape index: {1}]
  %14 = xla_tuple %s12, %s13
  %s15 = sld [smem:[#allocation0]]
  $region97: #{sym_gated_gcn_processor.1} parent=0
    _
  %s17 = ssub.s32 1, %s15
  %s18 = scalar_select 0, %s17, %s15
  $region1: #{sym_gated_gcn_processor.1} parent=0
    #allocation2 [shape = 'u8[327680]{0}', space=vmem, size = 0x50000, scoped, tag = 'input window, operand 6']
    #allocation3 [shape = 's32[2]{0}', space=sflag, size = 0x8, scoped, tag = 'scoped memory for sym_gated_gcn_processor.1']
    #allocation4 [shape = 's32[2]{0}', space=sflag, size = 0x8, scoped, tag = 'scoped memory for sym_gated_gcn_processor.1']
    #allocation5 [shape = 'u8[16384]{0}', space=vmem, size = 0x4000, scoped, tag = 'output window, operand 0, single buffered']
    %19 = vsyncpa [#allocation3], 0
    %s20 = scalar_lea.sflag [#allocation3], 1
    %21 = vsyncpa %s20, 0
    %22 = vsyncpa [#allocation4], 0
    loop: start=0, step=1, limit=4
    $region2: #{sym_gated_gcn_processor.1} parent=1 // loop_pre_header
      _
    $region3: #{sym_gated_gcn_processor.1} parent=1 // loop_header
      %s24 = sphi 0, %s28
      %p25 = scmp.ge.s32.totalorder %s24, 4
      %s32 = sphi 0, %s32
      %s34 = sphi 0, %s32
      %s35 = sphi 0, %s34
      %s49 = sphi 0, %s35
      %s53 = sphi 0, %s53
      %s55 = sphi 0, %s53
      %s56 = sphi 0, %s55
      %s70 = sphi 0, %s56
      %s74 = sphi 0, %s74
      %s76 = sphi 0, %s74
      %s77 = sphi 0, %s76
      %s91 = sphi 0, %s77
      %s95 = sphi 0, %s95
      %s97 = sphi 0, %s95
      %s98 = sphi 0, %s97
      %s112 = sphi 0, %s98
      %s116 = sphi 0, %s116
      %s118 = sphi 0, %s116
      %s119 = sphi 0, %s118
      %s133 = sphi 0, %s119
      %s137 = sphi 0, %s137
      %s139 = sphi 0, %s137
      %s140 = sphi 0, %s139
      %s154 = sphi 0, %s140
      %s160 = sphi 0, %s162
      %s163 = sphi 0, %s160
      %s164 = sphi 0, %s163
      %s180 = sphi 0, %s164
      %s186 = sphi 0, %s188
      %s189 = sphi 0, %s186
      %s190 = sphi 0, %s189
      %s206 = sphi 0, %s190
      %s212 = sphi 0, %s214
      %s215 = sphi 0, %s212
      %s216 = sphi 0, %s215
      %s232 = sphi 0, %s216
      %s238 = sphi 0, %s240
      %s241 = sphi 0, %s238
      %s242 = sphi 0, %s241
      %s258 = sphi 0, %s242
      %s264 = sphi 0, %s266
      %s267 = sphi 0, %s264
      %s268 = sphi 0, %s267
      %s284 = sphi 0, %s268
      %s290 = sphi 0, %s292
      %s293 = sphi 0, %s290
      %s294 = sphi 0, %s293
      %s310 = sphi 0, %s294
      %s314 = sphi 0, %s314
      %s316 = sphi 0, %s314
      %s317 = sphi 0, %s316
      %s331 = sphi 0, %s317
      %s335 = sphi 0, %s335
      %s337 = sphi 0, %s335
      %s338 = sphi 0, %s337
      %s352 = sphi 0, %s338
    $region4: #{sym_gated_gcn_processor.1} parent=1 // loop_header_branch
      %27 = sbr.rel (%p25) target = $region8
    $region5: #{sym_gated_gcn_processor.1} parent=1 // loop_body
      %s29 = ssub.s32 %s24, 1
      %s30 = ssub.s32 %s24, 2
      %s31 = sadd.s32 %s24, 1
      %s33 = sadd.s32 %s32, 1
      %p36 = scmp.eq.s32.totalorder %s24, 1
      %p37 = scmp.ne.s32.totalorder %s32, %s34
      %p38 = scmp.eq.s32.totalorder %s24, 0
      %p39 = por %p37, %p38
      %p40 = scmp.ne.s32.totalorder %s32, %s34
      %p41 = scmp.eq.s32.totalorder %s29, 1
      %p42 = por %p40, %p41
      %p43 = scmp.ne.s32.totalorder %s34, %s35
      %p44 = scmp.eq.s32.totalorder %s29, 0
      %p45 = por %p43, %p44
      %p46 = scmp.ne.s32.totalorder %s34, %s35
      %p47 = scmp.eq.s32.totalorder %s30, 1
      %p48 = por %p46, %p47
      %p50 = scmp.ne.s32.totalorder %s35, %s49
      %p51 = scmp.eq.s32.totalorder %s30, 0
      %p52 = por %p50, %p51
      %s54 = sadd.s32 %s53, 1
      %p57 = scmp.eq.s32.totalorder %s24, 1
      %p58 = scmp.ne.s32.totalorder %s53, %s55
      %p59 = scmp.eq.s32.totalorder %s24, 0
      %p60 = por %p58, %p59
      %p61 = scmp.ne.s32.totalorder %s53, %s55
      %p62 = scmp.eq.s32.totalorder %s29, 1
      %p63 = por %p61, %p62
      %p64 = scmp.ne.s32.totalorder %s55, %s56
      %p65 = scmp.eq.s32.totalorder %s29, 0
      %p66 = por %p64, %p65
      %p67 = scmp.ne.s32.totalorder %s55, %s56
      %p68 = scmp.eq.s32.totalorder %s30, 1
      %p69 = por %p67, %p68
      %p71 = scmp.ne.s32.totalorder %s56, %s70
      %p72 = scmp.eq.s32.totalorder %s30, 0
      %p73 = por %p71, %p72
      %s75 = sadd.s32 %s74, 1
      %p78 = scmp.eq.s32.totalorder %s24, 1
      %p79 = scmp.ne.s32.totalorder %s74, %s76
      %p80 = scmp.eq.s32.totalorder %s24, 0
      %p81 = por %p79, %p80
      %p82 = scmp.ne.s32.totalorder %s74, %s76
      %p83 = scmp.eq.s32.totalorder %s29, 1
      %p84 = por %p82, %p83
      %p85 = scmp.ne.s32.totalorder %s76, %s77
      %p86 = scmp.eq.s32.totalorder %s29, 0
      %p87 = por %p85, %p86
      %p88 = scmp.ne.s32.totalorder %s76, %s77
      %p89 = scmp.eq.s32.totalorder %s30, 1
      %p90 = por %p88, %p89
      %p92 = scmp.ne.s32.totalorder %s77, %s91
      %p93 = scmp.eq.s32.totalorder %s30, 0
      %p94 = por %p92, %p93
      %s96 = sadd.s32 %s95, 1
      %p99 = scmp.eq.s32.totalorder %s24, 1
      %p100 = scmp.ne.s32.totalorder %s95, %s97
      %p101 = scmp.eq.s32.totalorder %s24, 0
      %p102 = por %p100, %p101
      %p103 = scmp.ne.s32.totalorder %s95, %s97
      %p104 = scmp.eq.s32.totalorder %s29, 1
      %p105 = por %p103, %p104
      %p106 = scmp.ne.s32.totalorder %s97, %s98
      %p107 = scmp.eq.s32.totalorder %s29, 0
      %p108 = por %p106, %p107
      %p109 = scmp.ne.s32.totalorder %s97, %s98
      %p110 = scmp.eq.s32.totalorder %s30, 1
      %p111 = por %p109, %p110
      %p113 = scmp.ne.s32.totalorder %s98, %s112
      %p114 = scmp.eq.s32.totalorder %s30, 0
      %p115 = por %p113, %p114
      %s117 = sadd.s32 %s116, 1
      %p120 = scmp.eq.s32.totalorder %s24, 1
      %p121 = scmp.ne.s32.totalorder %s116, %s118
      %p122 = scmp.eq.s32.totalorder %s24, 0
      %p123 = por %p121, %p122
      %p124 = scmp.ne.s32.totalorder %s116, %s118
      %p125 = scmp.eq.s32.totalorder %s29, 1
      %p126 = por %p124, %p125
      %p127 = scmp.ne.s32.totalorder %s118, %s119
      %p128 = scmp.eq.s32.totalorder %s29, 0
      %p129 = por %p127, %p128
      %p130 = scmp.ne.s32.totalorder %s118, %s119
      %p131 = scmp.eq.s32.totalorder %s30, 1
      %p132 = por %p130, %p131
      %p134 = scmp.ne.s32.totalorder %s119, %s133
      %p135 = scmp.eq.s32.totalorder %s30, 0
      %p136 = por %p134, %p135
      %s138 = sadd.s32 %s137, 1
      %p141 = scmp.eq.s32.totalorder %s24, 1
      %p142 = scmp.ne.s32.totalorder %s137, %s139
      %p143 = scmp.eq.s32.totalorder %s24, 0
      %p144 = por %p142, %p143
      %p145 = scmp.ne.s32.totalorder %s137, %s139
      %p146 = scmp.eq.s32.totalorder %s29, 1
      %p147 = por %p145, %p146
      %p148 = scmp.ne.s32.totalorder %s139, %s140
      %p149 = scmp.eq.s32.totalorder %s29, 0
      %p150 = por %p148, %p149
      %p151 = scmp.ne.s32.totalorder %s139, %s140
      %p152 = scmp.eq.s32.totalorder %s30, 1
      %p153 = por %p151, %p152
      %p155 = scmp.ne.s32.totalorder %s140, %s154
      %p156 = scmp.eq.s32.totalorder %s30, 0
      %p157 = por %p155, %p156
      %s158 = ssub.s32 %s24, %s31
      %p159 = scmp.eq.s32.totalorder %s158, 0
      %s161 = sadd.s32 %s160, 1
      %s162 = scalar_select %p159, %s160, %s161
      %p165 = pneg %p159
      %p166 = scmp.eq.s32.totalorder %s24, 1
      %p167 = por %p165, %p166
      %p168 = scmp.ne.s32.totalorder %s160, %s163
      %p169 = scmp.eq.s32.totalorder %s24, 0
      %p170 = por %p168, %p169
      %p171 = scmp.ne.s32.totalorder %s160, %s163
      %p172 = scmp.eq.s32.totalorder %s29, 1
      %p173 = por %p171, %p172
      %p174 = scmp.ne.s32.totalorder %s163, %s164
      %p175 = scmp.eq.s32.totalorder %s29, 0
      %p176 = por %p174, %p175
      %p177 = scmp.ne.s32.totalorder %s163, %s164
      %p178 = scmp.eq.s32.totalorder %s30, 1
      %p179 = por %p177, %p178
      %p181 = scmp.ne.s32.totalorder %s164, %s180
      %p182 = scmp.eq.s32.totalorder %s30, 0
      %p183 = por %p181, %p182
      %s184 = ssub.s32 %s24, %s31
      %p185 = scmp.eq.s32.totalorder %s184, 0
      %s187 = sadd.s32 %s186, 1
      %s188 = scalar_select %p185, %s186, %s187
      %p191 = pneg %p185
      %p192 = scmp.eq.s32.totalorder %s24, 1
      %p193 = por %p191, %p192
      %p194 = scmp.ne.s32.totalorder %s186, %s189
      %p195 = scmp.eq.s32.totalorder %s24, 0
      %p196 = por %p194, %p195
      %p197 = scmp.ne.s32.totalorder %s186, %s189
      %p198 = scmp.eq.s32.totalorder %s29, 1
      %p199 = por %p197, %p198
      %p200 = scmp.ne.s32.totalorder %s189, %s190
      %p201 = scmp.eq.s32.totalorder %s29, 0
      %p202 = por %p200, %p201
      %p203 = scmp.ne.s32.totalorder %s189, %s190
      %p204 = scmp.eq.s32.totalorder %s30, 1
      %p205 = por %p203, %p204
      %p207 = scmp.ne.s32.totalorder %s190, %s206
      %p208 = scmp.eq.s32.totalorder %s30, 0
      %p209 = por %p207, %p208
      %s210 = ssub.s32 %s24, %s31
      %p211 = scmp.eq.s32.totalorder %s210, 0
      %s213 = sadd.s32 %s212, 1
      %s214 = scalar_select %p211, %s212, %s213
      %p217 = pneg %p211
      %p218 = scmp.eq.s32.totalorder %s24, 1
      %p219 = por %p217, %p218
      %p220 = scmp.ne.s32.totalorder %s212, %s215
      %p221 = scmp.eq.s32.totalorder %s24, 0
      %p222 = por %p220, %p221
      %p223 = scmp.ne.s32.totalorder %s212, %s215
      %p224 = scmp.eq.s32.totalorder %s29, 1
      %p225 = por %p223, %p224
      %p226 = scmp.ne.s32.totalorder %s215, %s216
      %p227 = scmp.eq.s32.totalorder %s29, 0
      %p228 = por %p226, %p227
      %p229 = scmp.ne.s32.totalorder %s215, %s216
      %p230 = scmp.eq.s32.totalorder %s30, 1
      %p231 = por %p229, %p230
      %p233 = scmp.ne.s32.totalorder %s216, %s232
      %p234 = scmp.eq.s32.totalorder %s30, 0
      %p235 = por %p233, %p234
      %s236 = ssub.s32 %s24, %s31
      %p237 = scmp.eq.s32.totalorder %s236, 0
      %s239 = sadd.s32 %s238, 1
      %s240 = scalar_select %p237, %s238, %s239
      %p243 = pneg %p237
      %p244 = scmp.eq.s32.totalorder %s24, 1
      %p245 = por %p243, %p244
      %p246 = scmp.ne.s32.totalorder %s238, %s241
      %p247 = scmp.eq.s32.totalorder %s24, 0
      %p248 = por %p246, %p247
      %p249 = scmp.ne.s32.totalorder %s238, %s241
      %p250 = scmp.eq.s32.totalorder %s29, 1
      %p251 = por %p249, %p250
      %p252 = scmp.ne.s32.totalorder %s241, %s242
      %p253 = scmp.eq.s32.totalorder %s29, 0
      %p254 = por %p252, %p253
      %p255 = scmp.ne.s32.totalorder %s241, %s242
      %p256 = scmp.eq.s32.totalorder %s30, 1
      %p257 = por %p255, %p256
      %p259 = scmp.ne.s32.totalorder %s242, %s258
      %p260 = scmp.eq.s32.totalorder %s30, 0
      %p261 = por %p259, %p260
      %s262 = ssub.s32 %s24, %s31
      %p263 = scmp.eq.s32.totalorder %s262, 0
      %s265 = sadd.s32 %s264, 1
      %s266 = scalar_select %p263, %s264, %s265
      %p269 = pneg %p263
      %p270 = scmp.eq.s32.totalorder %s24, 1
      %p271 = por %p269, %p270
      %p272 = scmp.ne.s32.totalorder %s264, %s267
      %p273 = scmp.eq.s32.totalorder %s24, 0
      %p274 = por %p272, %p273
      %p275 = scmp.ne.s32.totalorder %s264, %s267
      %p276 = scmp.eq.s32.totalorder %s29, 1
      %p277 = por %p275, %p276
      %p278 = scmp.ne.s32.totalorder %s267, %s268
      %p279 = scmp.eq.s32.totalorder %s29, 0
      %p280 = por %p278, %p279
      %p281 = scmp.ne.s32.totalorder %s267, %s268
      %p282 = scmp.eq.s32.totalorder %s30, 1
      %p283 = por %p281, %p282
      %p285 = scmp.ne.s32.totalorder %s268, %s284
      %p286 = scmp.eq.s32.totalorder %s30, 0
      %p287 = por %p285, %p286
      %s288 = ssub.s32 %s24, %s31
      %p289 = scmp.eq.s32.totalorder %s288, 0
      %s291 = sadd.s32 %s290, 1
      %s292 = scalar_select %p289, %s290, %s291
      %p295 = pneg %p289
      %p296 = scmp.eq.s32.totalorder %s24, 1
      %p297 = por %p295, %p296
      %p298 = scmp.ne.s32.totalorder %s290, %s293
      %p299 = scmp.eq.s32.totalorder %s24, 0
      %p300 = por %p298, %p299
      %p301 = scmp.ne.s32.totalorder %s290, %s293
      %p302 = scmp.eq.s32.totalorder %s29, 1
      %p303 = por %p301, %p302
      %p304 = scmp.ne.s32.totalorder %s293, %s294
      %p305 = scmp.eq.s32.totalorder %s29, 0
      %p306 = por %p304, %p305
      %p307 = scmp.ne.s32.totalorder %s293, %s294
      %p308 = scmp.eq.s32.totalorder %s30, 1
      %p309 = por %p307, %p308
      %p311 = scmp.ne.s32.totalorder %s294, %s310
      %p312 = scmp.eq.s32.totalorder %s30, 0
      %p313 = por %p311, %p312
      %s315 = sadd.s32 %s314, 1
      %p318 = scmp.eq.s32.totalorder %s24, 1
      %p319 = scmp.ne.s32.totalorder %s314, %s316
      %p320 = scmp.eq.s32.totalorder %s24, 0
      %p321 = por %p319, %p320
      %p322 = scmp.ne.s32.totalorder %s314, %s316
      %p323 = scmp.eq.s32.totalorder %s29, 1
      %p324 = por %p322, %p323
      %p325 = scmp.ne.s32.totalorder %s316, %s317
      %p326 = scmp.eq.s32.totalorder %s29, 0
      %p327 = por %p325, %p326
      %p328 = scmp.ne.s32.totalorder %s316, %s317
      %p329 = scmp.eq.s32.totalorder %s30, 1
      %p330 = por %p328, %p329
      %p332 = scmp.ne.s32.totalorder %s317, %s331
      %p333 = scmp.eq.s32.totalorder %s30, 0
      %p334 = por %p332, %p333
      %s336 = sadd.s32 %s335, 1
      %p339 = scmp.eq.s32.totalorder %s24, 1
      %p340 = scmp.ne.s32.totalorder %s335, %s337
      %p341 = scmp.eq.s32.totalorder %s24, 0
      %p342 = por %p340, %p341
      %p343 = scmp.ne.s32.totalorder %s335, %s337
      %p344 = scmp.eq.s32.totalorder %s29, 1
      %p345 = por %p343, %p344
      %p346 = scmp.ne.s32.totalorder %s337, %s338
      %p347 = scmp.eq.s32.totalorder %s29, 0
      %p348 = por %p346, %p347
      %p349 = scmp.ne.s32.totalorder %s337, %s338
      %p350 = scmp.eq.s32.totalorder %s30, 1
      %p351 = por %p349, %p350
      %p353 = scmp.ne.s32.totalorder %s338, %s352
      %p354 = scmp.eq.s32.totalorder %s30, 0
      %p355 = por %p353, %p354
      %p356 = scmp.le.s32.totalorder 1, %s24
      %p357 = scmp.lt.s32.totalorder %s24, 3
      %p358 = pnand %p356, %p357
      %p359 = pneg %p358
      // Predicated region
      $region9: #{sym_gated_gcn_processor.1} parent=5 // pred_check
        _
      $region10: #{sym_gated_gcn_processor.1} parent=5 // pred_check_branch
        %361 = sbr.rel (%p358) target = $region12
      $region11: #{sym_gated_gcn_processor.1} parent=5 // pred_region
        %s362 = ssub.s32 %s24, 1
        // Predicated region
        $region13: #{sym_gated_gcn_processor.1} parent=11 // pred_check
          %p363 = pneg %p45
        $region14: #{sym_gated_gcn_processor.1} parent=11 // pred_check_branch
          %365 = sbr.rel (%p363) target = $region16
        $region15: #{sym_gated_gcn_processor.1} parent=11 // pred_region
          _
        $region16: #{sym_gated_gcn_processor.1} parent=11 // pred_fallthru
          _
        // Predicated region
        $region17: #{sym_gated_gcn_processor.1} parent=11 // pred_check
          %p366 = pneg %p66
        $region18: #{sym_gated_gcn_processor.1} parent=11 // pred_check_branch
          %368 = sbr.rel (%p366) target = $region20
        $region19: #{sym_gated_gcn_processor.1} parent=11 // pred_region
          _
        $region20: #{sym_gated_gcn_processor.1} parent=11 // pred_fallthru
          _
        // Predicated region
        $region21: #{sym_gated_gcn_processor.1} parent=11 // pred_check
          %p369 = pneg %p87
        $region22: #{sym_gated_gcn_processor.1} parent=11 // pred_check_branch
          %371 = sbr.rel (%p369) target = $region24
        $region23: #{sym_gated_gcn_processor.1} parent=11 // pred_region
          _
        $region24: #{sym_gated_gcn_processor.1} parent=11 // pred_fallthru
          _
        // Predicated region
        $region25: #{sym_gated_gcn_processor.1} parent=11 // pred_check
          %p372 = pneg %p108
        $region26: #{sym_gated_gcn_processor.1} parent=11 // pred_check_branch
          %374 = sbr.rel (%p372) target = $region28
        $region27: #{sym_gated_gcn_processor.1} parent=11 // pred_region
          _
        $region28: #{sym_gated_gcn_processor.1} parent=11 // pred_fallthru
          _
        // Predicated region
        $region29: #{sym_gated_gcn_processor.1} parent=11 // pred_check
          %p375 = pneg %p129
        $region30: #{sym_gated_gcn_processor.1} parent=11 // pred_check_branch
          %377 = sbr.rel (%p375) target = $region32
        $region31: #{sym_gated_gcn_processor.1} parent=11 // pred_region
          _
        $region32: #{sym_gated_gcn_processor.1} parent=11 // pred_fallthru
          _
        // Predicated region
        $region33: #{sym_gated_gcn_processor.1} parent=11 // pred_check
          %p378 = pneg %p150
        $region34: #{sym_gated_gcn_processor.1} parent=11 // pred_check_branch
          %380 = sbr.rel (%p378) target = $region36
        $region35: #{sym_gated_gcn_processor.1} parent=11 // pred_region
          _
        $region36: #{sym_gated_gcn_processor.1} parent=11 // pred_fallthru
          _
      $region12: #{sym_gated_gcn_processor.1} parent=5 // pred_fallthru
        _
      %p381 = scmp.lt.s32.totalorder %s24, 2
      // Predicated region
      $region37: #{sym_gated_gcn_processor.1} parent=5 // pred_check
        %p382 = pneg %p381
      $region38: #{sym_gated_gcn_processor.1} parent=5 // pred_check_branch
        %384 = sbr.rel (%p382) target = $region40
      $region39: #{sym_gated_gcn_processor.1} parent=5 // pred_region
        // Predicated region
        $region41: #{sym_gated_gcn_processor.1} parent=39 // pred_check
          %p385 = pneg %p170
        $region42: #{sym_gated_gcn_processor.1} parent=39 // pred_check_branch
          %387 = sbr.rel (%p385) target = $region44
        $region43: #{sym_gated_gcn_processor.1} parent=39 // pred_region
          %s388 = sand.u32 %s160, 1
          %s389 = scalar_lea.sflag [#allocation3], %s388
          %s390 = sand.u32 %s160, 1
          %s391 = smul.addr %s390, 320
          %s392 = scalar_lea.vmem [#allocation2], %s391
          %s394 = ssub.s32 5120, 5120
          %395 = vsyncadd %s389, %s394
          %s396 = smul.addr %s24, 80
          %s397 = smul.addr %s396, 64
          %s398 = scalar_lea.hbm %s6, %s397
          %s399 = sshll.u32 %s392, 4
          %s400 = int_to_ptr.vmem [resolvable:$true] %s399
          %405 = dma.hbm_to_vmem [thread:$0]  %s398, 5120, %s400, %s389, 320, 320, 20
        $region44: #{sym_gated_gcn_processor.1} parent=39 // pred_fallthru
          _
        // Predicated region
        $region45: #{sym_gated_gcn_processor.1} parent=39 // pred_check
          %p406 = pneg %p196
        $region46: #{sym_gated_gcn_processor.1} parent=39 // pred_check_branch
          %408 = sbr.rel (%p406) target = $region48
        $region47: #{sym_gated_gcn_processor.1} parent=39 // pred_region
          %p409 = scmp.lt.s32.totalorder %s24, 1
          %s410 = scalar_select %p409, %s24, 1
          %s411 = smul.addr %s410, 5
          %s412 = scalar_lea.vmem %s7, %s411
        $region48: #{sym_gated_gcn_processor.1} parent=39 // pred_fallthru
          _
        // Predicated region
        $region49: #{sym_gated_gcn_processor.1} parent=39 // pred_check
          %p413 = pneg %p222
        $region50: #{sym_gated_gcn_processor.1} parent=39 // pred_check_branch
          %415 = sbr.rel (%p413) target = $region52
        $region51: #{sym_gated_gcn_processor.1} parent=39 // pred_region
          %p416 = scmp.lt.s32.totalorder %s24, 1
          %s417 = scalar_select %p416, %s24, 1
          %s418 = smul.addr %s417, 16
          %s419 = smul.addr %s418, 4
          %s420 = scalar_lea.vmem %s8, %s419
        $region52: #{sym_gated_gcn_processor.1} parent=39 // pred_fallthru
          _
        // Predicated region
        $region53: #{sym_gated_gcn_processor.1} parent=39 // pred_check
          %p421 = pneg %p248
        $region54: #{sym_gated_gcn_processor.1} parent=39 // pred_check_branch
          %423 = sbr.rel (%p421) target = $region56
        $region55: #{sym_gated_gcn_processor.1} parent=39 // pred_region
          %p424 = scmp.lt.s32.totalorder %s24, 1
          %s425 = scalar_select %p424, %s24, 1
          %s426 = scalar_lea.vmem %s9, %s425
        $region56: #{sym_gated_gcn_processor.1} parent=39 // pred_fallthru
          _
        // Predicated region
        $region57: #{sym_gated_gcn_processor.1} parent=39 // pred_check
          %p427 = pneg %p274
        $region58: #{sym_gated_gcn_processor.1} parent=39 // pred_check_branch
          %429 = sbr.rel (%p427) target = $region60
        $region59: #{sym_gated_gcn_processor.1} parent=39 // pred_region
          %p430 = scmp.lt.s32.totalorder %s24, 1
          %s431 = scalar_select %p430, %s24, 1
          %s432 = smul.addr %s431, 2
          %s433 = scalar_lea.vmem %s10, %s432
        $region60: #{sym_gated_gcn_processor.1} parent=39 // pred_fallthru
          _
        // Predicated region
        $region61: #{sym_gated_gcn_processor.1} parent=39 // pred_check
          %p434 = pneg %p300
        $region62: #{sym_gated_gcn_processor.1} parent=39 // pred_check_branch
          %436 = sbr.rel (%p434) target = $region64
        $region63: #{sym_gated_gcn_processor.1} parent=39 // pred_region
          %p437 = scmp.lt.s32.totalorder %s24, 1
          %s438 = scalar_select %p437, %s24, 1
          %s439 = smul.addr %s438, 2
          %s440 = scalar_lea.vmem %s11, %s439
        $region64: #{sym_gated_gcn_processor.1} parent=39 // pred_fallthru
          _
      $region40: #{sym_gated_gcn_processor.1} parent=5 // pred_fallthru
        _
      %p441 = scmp.le.s32.totalorder 1, %s24
      %p442 = scmp.lt.s32.totalorder %s24, 3
      %p443 = pnand %p441, %p442
      %p444 = pneg %p443
      // Predicated region
      $region65: #{sym_gated_gcn_processor.1} parent=5 // pred_check
        _
      $region66: #{sym_gated_gcn_processor.1} parent=5 // pred_check_branch
        %446 = sbr.rel (%p443) target = $region68
      $region67: #{sym_gated_gcn_processor.1} parent=5 // pred_region
        %s447 = ssub.s32 %s24, 1
        %s448 = sand.u32 %s163, 1
        %s449 = scalar_lea.sflag [#allocation3], %s448
        %s450 = sand.u32 %s163, 1
        %s451 = smul.addr %s450, 320
        %s452 = scalar_lea.vmem [#allocation2], %s451
        // Predicated region
        $region69: #{sym_gated_gcn_processor.1} parent=67 // pred_check
          %p453 = pneg %p176
        $region70: #{sym_gated_gcn_processor.1} parent=67 // pred_check_branch
          %455 = sbr.rel (%p453) target = $region72
        $region71: #{sym_gated_gcn_processor.1} parent=67 // pred_region
          %456 = dma.done %s449, 5120
        $region72: #{sym_gated_gcn_processor.1} parent=67 // pred_fallthru
          _
        %p457 = pneg %p45
        %p458 = pneg %p42
        %p459 = pneg %p66
        %p460 = pneg %p63
        %p461 = pneg %p87
        %p462 = pneg %p84
        %p463 = pneg %p108
        %p464 = pneg %p105
        %p465 = pneg %p129
        %p466 = pneg %p126
        %p467 = pneg %p150
        %p468 = pneg %p147
        %s469 = sand.u32 %s163, 1
        %s470 = scalar_lea.sflag [#allocation3], %s469
        %s471 = sand.u32 %s163, 1
        %s472 = smul.addr %s471, 320
        %s473 = scalar_lea.vmem [#allocation2], %s472
        %p474 = pneg %p176
        %p475 = pneg %p173
        %p476 = scmp.lt.s32.totalorder %s29, 1
        %s477 = scalar_select %p476, %s29, 1
        %s478 = smul.addr %s477, 5
        %s479 = scalar_lea.vmem %s7, %s478
        %p480 = pneg %p202
        %p481 = pneg %p199
        %p482 = scmp.lt.s32.totalorder %s29, 1
        %s483 = scalar_select %p482, %s29, 1
        %s484 = smul.addr %s483, 16
        %s485 = smul.addr %s484, 4
        %s486 = scalar_lea.vmem %s8, %s485
        %p487 = pneg %p228
        %p488 = pneg %p225
        %p489 = scmp.lt.s32.totalorder %s29, 1
        %s490 = scalar_select %p489, %s29, 1
        %s491 = scalar_lea.vmem %s9, %s490
        %p492 = pneg %p254
        %p493 = pneg %p251
        %p494 = scmp.lt.s32.totalorder %s29, 1
        %s495 = scalar_select %p494, %s29, 1
        %s496 = smul.addr %s495, 2
        %s497 = scalar_lea.vmem %s10, %s496
        %p498 = pneg %p280
        %p499 = pneg %p277
        %p500 = scmp.lt.s32.totalorder %s29, 1
        %s501 = scalar_select %p500, %s29, 1
        %s502 = smul.addr %s501, 2
        %s503 = scalar_lea.vmem %s11, %s502
        %p504 = pneg %p306
        %p505 = pneg %p303
        %p506 = pneg %p327
        %p507 = pneg %p324
        %p508 = pneg %p348
        %p509 = pneg %p345
        %p510 = scmp.lt.s32.totalorder %s29, 1
        %s511 = scalar_select %p510, %s29, 1
        %s512 = smul.addr %s511, 5
        %s513 = scalar_lea.vmem %s7, %s512
        %p514 = scmp.lt.s32.totalorder %s29, 1
        %s515 = scalar_select %p514, %s29, 1
        %s516 = smul.addr %s515, 16
        %s517 = smul.addr %s516, 4
        %s518 = scalar_lea.vmem %s8, %s517
        %p519 = scmp.lt.s32.totalorder %s29, 1
        %s520 = scalar_select %p519, %s29, 1
        %s521 = scalar_lea.vmem %s9, %s520
        %p522 = scmp.lt.s32.totalorder %s29, 1
        %s523 = scalar_select %p522, %s29, 1
        %s524 = smul.addr %s523, 2
        %s525 = scalar_lea.vmem %s10, %s524
        %p526 = scmp.lt.s32.totalorder %s29, 1
        %s527 = scalar_select %p526, %s29, 1
        %s528 = smul.addr %s527, 2
        %s529 = scalar_lea.vmem %s11, %s528
        %p531 = scmp.eq.s32.totalorder %s29, 0
        // Predicated region
        $region73: #{sym_gated_gcn_processor.1} parent=67 // pred_check
          %p532 = pneg %p531
        $region74: #{sym_gated_gcn_processor.1} parent=67 // pred_check_branch
          %534 = sbr.rel (%p532) target = $region76
        $region75: #{sym_gated_gcn_processor.1} parent=67 // pred_region
          %v535 = vld [vmem:[%s4] sm:$0xff]
          %v536 = vld [vmem:[%s4 + $0x8] sm:$0xff]
          %v537 = vld [vmem:[%s4 + $0x10] sm:$0xff]
          %v538 = vld [vmem:[%s4 + $0x18] sm:$0xff]
          %539 = vst [vmem:[#allocation5] sm:$0xff] %v535
          %540 = vst [vmem:[#allocation5 + $0x8] sm:$0xff] %v536
          %541 = vst [vmem:[#allocation5 + $0x10] sm:$0xff] %v537
          %542 = vst [vmem:[#allocation5 + $0x18] sm:$0xff] %v538
          %v543 = vld [vmem:[%s5] sm:$0xff]
          %v544 = vld [vmem:[%s5 + $0x8] sm:$0xff]
          %v545 = vld [vmem:[%s5 + $0x10] sm:$0xff]
          %v546 = vld [vmem:[%s5 + $0x18] sm:$0xff]
          %v547 = vld [vmem:[%s5 + $0x20] sm:$0xff]
          %v548 = vld [vmem:[%s5 + $0x28] sm:$0xff]
          %v549 = vld [vmem:[%s5 + $0x30] sm:$0xff]
          %v550 = vld [vmem:[%s5 + $0x38] sm:$0xff]
          %551 = vst [vmem:[%s13] sm:$0xff] %v543
          %552 = vst [vmem:[%s13 + $0x8] sm:$0xff] %v544
          %553 = vst [vmem:[%s13 + $0x10] sm:$0xff] %v545
          %554 = vst [vmem:[%s13 + $0x18] sm:$0xff] %v546
          %555 = vst [vmem:[%s13 + $0x20] sm:$0xff] %v547
          %556 = vst [vmem:[%s13 + $0x28] sm:$0xff] %v548
          %557 = vst [vmem:[%s13 + $0x30] sm:$0xff] %v549
          %558 = vst [vmem:[%s13 + $0x38] sm:$0xff] %v550
        $region76: #{sym_gated_gcn_processor.1} parent=67 // pred_fallthru
          _
        %v559 = vld [vmem:[#allocation5] sm:$0xff]
        %v560 = vld [vmem:[#allocation5 + $0x8] sm:$0xff]
        %v561 = vld [vmem:[#allocation5 + $0x10] sm:$0xff]
        %v562 = vld [vmem:[#allocation5 + $0x18] sm:$0xff]
        %v563 = vld [vmem:[%s13] sm:$0xff]
        %v564 = vld [vmem:[%s13 + $0x8] sm:$0xff]
        %v565 = vld [vmem:[%s13 + $0x10] sm:$0xff]
        %v566 = vld [vmem:[%s13 + $0x18] sm:$0xff]
        %v567 = vld [vmem:[%s13 + $0x20] sm:$0xff]
        %v568 = vld [vmem:[%s13 + $0x28] sm:$0xff]
        %v569 = vld [vmem:[%s13 + $0x30] sm:$0xff]
        %v570 = vld [vmem:[%s13 + $0x38] sm:$0xff]
        %v571 = vld [vmem:[%s0] sm:$0xf]
        %v572 = vld [vmem:[%s0 + $0x4] sm:$0xf]
        %v573 = vld [vmem:[%s0 + $0x8] sm:$0xf]
        %v574 = vld [vmem:[%s0 + $0xc] sm:$0xf]
        %v575 = vld [vmem:[%s0 + $0x10] sm:$0xf]
        %v576 = vld [vmem:[%s0 + $0x14] sm:$0xf]
        %v577 = vld [vmem:[%s0 + $0x18] sm:$0xf]
        %v578 = vld [vmem:[%s0 + $0x1c] sm:$0xf]
        %v579 = vld [vmem:[%s1] sm:$0xf]
        %v580 = vld [vmem:[%s1 + $0x4] sm:$0xf]
        %v581 = vld [vmem:[%s1 + $0x8] sm:$0xf]
        %v582 = vld [vmem:[%s1 + $0xc] sm:$0xf]
        %v583 = vld [vmem:[%s1 + $0x10] sm:$0xf]
        %v584 = vld [vmem:[%s1 + $0x14] sm:$0xf]
        %v585 = vld [vmem:[%s1 + $0x18] sm:$0xf]
        %v586 = vld [vmem:[%s1 + $0x1c] sm:$0xf]
        %v587 = vld [vmem:[%s2] sm:$0xf]
        %v588 = vld [vmem:[%s2 + $0x4] sm:$0xf]
        %v589 = vld [vmem:[%s2 + $0x8] sm:$0xf]
        %v590 = vld [vmem:[%s2 + $0xc] sm:$0xf]
        %v591 = vld [vmem:[%s3] sm:$0xf]
        %v592 = vld [vmem:[%s3 + $0x4] sm:$0xf]
        %v593 = vld [vmem:[%s3 + $0x8] sm:$0xf]
        %v594 = vld [vmem:[%s3 + $0xc] sm:$0xf]
        %v595 = vpack.c.bf16 %v560, %v559
        %v596 = vpack.c.bf16 %v562, %v561
        %v597 = vld [vmem:[%s452] sm:$0xff]
        %v598 = vld [vmem:[%s452 + $0x8] sm:$0xff]
        %v599 = vld [vmem:[%s452 + $0x10] sm:$0xf]
        %v600 = vld [vmem:[%s452 + $0x14] sm:$0xff]
        %v601 = vld [vmem:[%s452 + $0x1c] sm:$0xff]
        %v602 = vld [vmem:[%s452 + $0x24] sm:$0xf]
        %v603 = vld [vmem:[%s452 + $0x28] sm:$0xff]
        %v604 = vld [vmem:[%s452 + $0x30] sm:$0xff]
        %v605 = vld [vmem:[%s452 + $0x38] sm:$0xf]
        %v606 = vld [vmem:[%s452 + $0x3c] sm:$0xff]
        %v607 = vld [vmem:[%s452 + $0x44] sm:$0xff]
        %v608 = vld [vmem:[%s452 + $0x4c] sm:$0xf]
        %v609 = vld [vmem:[%s452 + $0x50] sm:$0xff]
        %v610 = vld [vmem:[%s452 + $0x58] sm:$0xff]
        %v611 = vld [vmem:[%s452 + $0x60] sm:$0xf]
        %v612 = vld [vmem:[%s452 + $0x64] sm:$0xff]
        %v613 = vld [vmem:[%s452 + $0x6c] sm:$0xff]
        %v614 = vld [vmem:[%s452 + $0x74] sm:$0xf]
        %v615 = vld [vmem:[%s452 + $0x78] sm:$0xff]
        %v616 = vld [vmem:[%s452 + $0x80] sm:$0xff]
        %v617 = vld [vmem:[%s452 + $0x88] sm:$0xf]
        %v618 = vld [vmem:[%s452 + $0x8c] sm:$0xff]
        %v619 = vld [vmem:[%s452 + $0x94] sm:$0xff]
        %v620 = vld [vmem:[%s452 + $0x9c] sm:$0xf]
        %v621 = vld [vmem:[%s452 + $0xa0] sm:$0xff]
        %v622 = vld [vmem:[%s452 + $0xa8] sm:$0xff]
        %v623 = vld [vmem:[%s452 + $0xb0] sm:$0xf]
        %v624 = vld [vmem:[%s452 + $0xb4] sm:$0xff]
        %v625 = vld [vmem:[%s452 + $0xbc] sm:$0xff]
        %v626 = vld [vmem:[%s452 + $0xc4] sm:$0xf]
        %v627 = vld [vmem:[%s452 + $0xc8] sm:$0xff]
        %v628 = vld [vmem:[%s452 + $0xd0] sm:$0xff]
        %v629 = vld [vmem:[%s452 + $0xd8] sm:$0xf]
        %v630 = vld [vmem:[%s452 + $0xdc] sm:$0xff]
        %v631 = vld [vmem:[%s452 + $0xe4] sm:$0xff]
        %v632 = vld [vmem:[%s452 + $0xec] sm:$0xf]
        %v633 = vld [vmem:[%s452 + $0xf0] sm:$0xff]
        %v634 = vld [vmem:[%s452 + $0xf8] sm:$0xff]
        %v635 = vld [vmem:[%s452 + $0x100] sm:$0xf]
        %v636 = vld [vmem:[%s452 + $0x104] sm:$0xff]
        %v637 = vld [vmem:[%s452 + $0x10c] sm:$0xff]
        %v638 = vld [vmem:[%s452 + $0x114] sm:$0xf]
        %v639 = vld [vmem:[%s452 + $0x118] sm:$0xff]
        %v640 = vld [vmem:[%s452 + $0x120] sm:$0xff]
        %v641 = vld [vmem:[%s452 + $0x128] sm:$0xf]
        %v642 = vld [vmem:[%s452 + $0x12c] sm:$0xff]
        %v643 = vld [vmem:[%s452 + $0x134] sm:$0xff]
        %v644 = vld [vmem:[%s452 + $0x13c] sm:$0xf]
        %v645 = vld [vmem:[%s513] sm:$0x1f]
        %v647 = vlaneseq
        %v648 = vshrl.u32 %v647, 7
        %v649 = vsub.s32 0, %v648
        %v650 = vrot.slane %v645, %v649
        %v651 = vlaneseq
        %v652 = vshrl.u32 %v651, 7
        %v653 = vsub.s32 1, %v652
        %v654 = vrot.slane %v645, %v653
        %v655 = vlaneseq
        %v656 = vshrl.u32 %v655, 7
        %v657 = vsub.s32 2, %v656
        %v658 = vrot.slane %v645, %v657
        %v659 = vlaneseq
        %v660 = vshrl.u32 %v659, 7
        %v661 = vsub.s32 3, %v660
        %v662 = vrot.slane %v645, %v661
        %v663 = vlaneseq
        %v664 = vshrl.u32 %v663, 7
        %v665 = vsub.s32 4, %v664
        %v666 = vrot.slane %v645, %v665
        %v720 = vunpack.c.l.b16 %v597
        %v721 = vunpack.c.h.b16 %v597
        %v722 = vunpack.c.l.b16 %v598
        %v723 = vunpack.c.h.b16 %v598
        %v724 = vunpack.c.l.b16 %v599
        %v725 = vunpack.c.l.b16 %v600
        %v726 = vunpack.c.h.b16 %v600
        %v727 = vunpack.c.l.b16 %v601
        %v728 = vunpack.c.h.b16 %v601
        %v729 = vunpack.c.l.b16 %v602
        %v730 = vunpack.c.l.b16 %v603
        %v731 = vunpack.c.h.b16 %v603
        %v732 = vunpack.c.l.b16 %v604
        %v733 = vunpack.c.h.b16 %v604
        %v734 = vunpack.c.l.b16 %v605
        %v735 = vunpack.c.l.b16 %v606
        %v736 = vunpack.c.h.b16 %v606
        %v737 = vunpack.c.l.b16 %v607
        %v738 = vunpack.c.h.b16 %v607
        %v739 = vunpack.c.l.b16 %v608
        %v740 = vunpack.c.l.b16 %v609
        %v741 = vunpack.c.h.b16 %v609
        %v742 = vunpack.c.l.b16 %v610
        %v743 = vunpack.c.h.b16 %v610
        %v744 = vunpack.c.l.b16 %v611
        %v745 = vunpack.c.l.b16 %v612
        %v746 = vunpack.c.h.b16 %v612
        %v747 = vunpack.c.l.b16 %v613
        %v748 = vunpack.c.h.b16 %v613
        %v749 = vunpack.c.l.b16 %v614
        %v750 = vunpack.c.l.b16 %v615
        %v751 = vunpack.c.h.b16 %v615
        %v752 = vunpack.c.l.b16 %v616
        %v753 = vunpack.c.h.b16 %v616
        %v754 = vunpack.c.l.b16 %v617
        %v755 = vunpack.c.l.b16 %v618
        %v756 = vunpack.c.h.b16 %v618
        %v757 = vunpack.c.l.b16 %v619
        %v758 = vunpack.c.h.b16 %v619
        %v759 = vunpack.c.l.b16 %v620
        %v760 = vunpack.c.l.b16 %v621
        %v761 = vunpack.c.h.b16 %v621
        %v762 = vunpack.c.l.b16 %v622
        %v763 = vunpack.c.h.b16 %v622
        %v764 = vunpack.c.l.b16 %v623
        %v765 = vunpack.c.l.b16 %v624
        %v766 = vunpack.c.h.b16 %v624
        %v767 = vunpack.c.l.b16 %v625
        %v768 = vunpack.c.h.b16 %v625
        %v769 = vunpack.c.l.b16 %v626
        %v770 = vunpack.c.l.b16 %v627
        %v771 = vunpack.c.h.b16 %v627
        %v772 = vunpack.c.l.b16 %v628
        %v773 = vunpack.c.h.b16 %v628
        %v774 = vunpack.c.l.b16 %v629
        %v775 = vunpack.c.l.b16 %v630
        %v776 = vunpack.c.h.b16 %v630
        %v777 = vunpack.c.l.b16 %v631
        %v778 = vunpack.c.h.b16 %v631
        %v779 = vunpack.c.l.b16 %v632
        %v780 = vunpack.c.l.b16 %v633
        %v781 = vunpack.c.h.b16 %v633
        %v782 = vunpack.c.l.b16 %v634
        %v783 = vunpack.c.h.b16 %v634
        %v784 = vunpack.c.l.b16 %v635
        %v785 = vunpack.c.l.b16 %v636
        %v786 = vunpack.c.h.b16 %v636
        %v787 = vunpack.c.l.b16 %v637
        %v788 = vunpack.c.h.b16 %v637
        %v789 = vunpack.c.l.b16 %v638
        %v790 = vunpack.c.l.b16 %v639
        %v791 = vunpack.c.h.b16 %v639
        %v792 = vunpack.c.l.b16 %v640
        %v793 = vunpack.c.h.b16 %v640
        %v794 = vunpack.c.l.b16 %v641
        %v795 = vunpack.c.l.b16 %v642
        %v796 = vunpack.c.h.b16 %v642
        %v797 = vunpack.c.l.b16 %v643
        %v798 = vunpack.c.h.b16 %v643
        %v799 = vunpack.c.l.b16 %v644
        %v800 = vpack.c.b16 %v725, %v720
        %v801 = vpack.c.b16 %v726, %v721
        %v802 = vpack.c.b16 %v727, %v722
        %v803 = vpack.c.b16 %v728, %v723
        %v804 = vpack.c.b16 %v729, %v724
        %v805 = vpack.c.b16 %v735, %v730
        %v806 = vpack.c.b16 %v736, %v731
        %v807 = vpack.c.b16 %v737, %v732
        %v808 = vpack.c.b16 %v738, %v733
        %v809 = vpack.c.b16 %v739, %v734
        %v810 = vpack.c.b16 %v745, %v740
        %v811 = vpack.c.b16 %v746, %v741
        %v812 = vpack.c.b16 %v747, %v742
        %v813 = vpack.c.b16 %v748, %v743
        %v814 = vpack.c.b16 %v749, %v744
        %v815 = vpack.c.b16 %v755, %v750
        %v816 = vpack.c.b16 %v756, %v751
        %v817 = vpack.c.b16 %v757, %v752
        %v818 = vpack.c.b16 %v758, %v753
        %v819 = vpack.c.b16 %v759, %v754
        %v820 = vpack.c.b16 %v765, %v760
        %v821 = vpack.c.b16 %v766, %v761
        %v822 = vpack.c.b16 %v767, %v762
        %v823 = vpack.c.b16 %v768, %v763
        %v824 = vpack.c.b16 %v769, %v764
        %v825 = vpack.c.b16 %v775, %v770
        %v826 = vpack.c.b16 %v776, %v771
        %v827 = vpack.c.b16 %v777, %v772
        %v828 = vpack.c.b16 %v778, %v773
        %v829 = vpack.c.b16 %v779, %v774
        %v830 = vpack.c.b16 %v785, %v780
        %v831 = vpack.c.b16 %v786, %v781
        %v832 = vpack.c.b16 %v787, %v782
        %v833 = vpack.c.b16 %v788, %v783
        %v834 = vpack.c.b16 %v789, %v784
        %v835 = vpack.c.b16 %v795, %v790
        %v836 = vpack.c.b16 %v796, %v791
        %v837 = vpack.c.b16 %v797, %v792
        %v838 = vpack.c.b16 %v798, %v793
        %v839 = vpack.c.b16 %v799, %v794
        %880 = vmatprep.subr.bf16.mxu0 %v836
        %881 = vmatpush1.bf16.msra.mxu0 %v835
        %882 = vmatprep.subr.bf16.mxu0 %v831
        %883 = vmatpush1.bf16.msra.mxu0 %v830
        %884 = vmatprep.subr.bf16.mxu0 %v826
        %885 = vmatpush1.bf16.msra.mxu0 %v825
        %886 = vmatprep.subr.bf16.mxu0 %v821
        %887 = vmatpush1.bf16.msra.mxu0 %v820
        %888 = vmatprep.subr.bf16.mxu0 %v816
        %889 = vmatpush1.bf16.msra.mxu0 %v815
        %890 = vmatprep.subr.bf16.mxu0 %v811
        %891 = vmatpush1.bf16.msra.mxu0 %v810
        %892 = vmatprep.subr.bf16.mxu0 %v806
        %893 = vmatpush1.bf16.msra.mxu0 %v805
        %894 = vmatprep.subr.bf16.mxu0 %v801
        %895 = vmatpush1.bf16.msra.mxu0 %v800
        %896 = vmatprep.subr.bf16.mxu0 0
        %897 = vmatpush2.bf16.msra.mxu0 0
        %898 = vmatprep.subr.bf16.mxu0 0
        %899 = vmatpush2.bf16.msra.mxu0 0
        %900 = vmatprep.subr.bf16.mxu0 0
        %901 = vmatpush2.bf16.msra.mxu0 0
        %902 = vmatprep.subr.bf16.mxu0 0
        %903 = vmatpush2.bf16.msra.mxu0 0
        %904 = vmatprep.subr.bf16.mxu0 0
        %905 = vmatpush2.bf16.msra.mxu0 0
        %906 = vmatprep.subr.bf16.mxu0 0
        %907 = vmatpush2.bf16.msra.mxu0 0
        %908 = vmatprep.subr.bf16.mxu0 0
        %909 = vmatpush2.bf16.msra.mxu0 0
        %910 = vmatprep.subr.bf16.mxu0 0
        %911 = vmatpush2.bf16.msra.mxu0 0
        %912 = vmatprep.mubr.bf16.mxu0 0
        %913 = vmatmul.mubr.bf16.gmra.mxu0 %v595
        %v914 = vpop.f32.mrf.mxu0
        %v915 = vadd.f32 %v650, %v914
        %v916 = vpop.f32.mrf.mxu0
        %v917 = vadd.f32 %v654, %v916
        %v918 = vpop.f32.mrf.mxu0
        %v919 = vadd.f32 %v650, %v918
        %v920 = vpop.f32.mrf.mxu0
        %v921 = vadd.f32 %v654, %v920
        %922 = vmatprep.mubr.bf16.mxu0 0
        %923 = vmatmul.mubr.bf16.gmra.mxu0 %v596
        %v924 = vpop.f32.mrf.mxu0
        %v925 = vadd.f32 %v650, %v924
        %v926 = vpop.f32.mrf.mxu0
        %v927 = vadd.f32 %v654, %v926
        %v928 = vpop.f32.mrf.mxu0
        %v929 = vadd.f32 %v650, %v928
        %v930 = vpop.f32.mrf.mxu0
        %v931 = vadd.f32 %v654, %v930
        %932 = vdwg.mxu0
        %933 = vmatprep.subr.bf16.mxu0 %v838
        %934 = vmatpush1.bf16.msra.mxu0 %v837
        %935 = vmatprep.subr.bf16.mxu0 %v833
        %936 = vmatpush1.bf16.msra.mxu0 %v832
        %937 = vmatprep.subr.bf16.mxu0 %v828
        %938 = vmatpush1.bf16.msra.mxu0 %v827
        %939 = vmatprep.subr.bf16.mxu0 %v823
        %940 = vmatpush1.bf16.msra.mxu0 %v822
        %941 = vmatprep.subr.bf16.mxu0 %v818
        %942 = vmatpush1.bf16.msra.mxu0 %v817
        %943 = vmatprep.subr.bf16.mxu0 %v813
        %944 = vmatpush1.bf16.msra.mxu0 %v812
        %945 = vmatprep.subr.bf16.mxu0 %v808
        %946 = vmatpush1.bf16.msra.mxu0 %v807
        %947 = vmatprep.subr.bf16.mxu0 %v803
        %948 = vmatpush1.bf16.msra.mxu0 %v802
        %949 = vmatprep.subr.bf16.mxu0 0
        %950 = vmatpush2.bf16.msra.mxu0 0
        %951 = vmatprep.subr.bf16.mxu0 0
        %952 = vmatpush2.bf16.msra.mxu0 0
        %953 = vmatprep.subr.bf16.mxu0 0
        %954 = vmatpush2.bf16.msra.mxu0 0
        %955 = vmatprep.subr.bf16.mxu0 0
        %956 = vmatpush2.bf16.msra.mxu0 0
        %957 = vmatprep.subr.bf16.mxu0 0
        %958 = vmatpush2.bf16.msra.mxu0 0
        %959 = vmatprep.subr.bf16.mxu0 0
        %960 = vmatpush2.bf16.msra.mxu0 0
        %961 = vmatprep.subr.bf16.mxu0 0
        %962 = vmatpush2.bf16.msra.mxu0 0
        %963 = vmatprep.subr.bf16.mxu0 0
        %964 = vmatpush2.bf16.msra.mxu0 0
        %965 = vmatprep.mubr.bf16.mxu0 0
        %966 = vmatmul.mubr.bf16.gmra.mxu0 %v595
        %v967 = vpop.f32.mrf.mxu0
        %v968 = vadd.f32 %v658, %v967
        %v969 = vpop.f32.mrf.mxu0
        %v970 = vadd.f32 %v662, %v969
        %v971 = vpop.f32.mrf.mxu0
        %v972 = vadd.f32 %v658, %v971
        %v973 = vpop.f32.mrf.mxu0
        %v974 = vadd.f32 %v662, %v973
        %975 = vmatprep.mubr.bf16.mxu0 0
        %976 = vmatmul.mubr.bf16.gmra.mxu0 %v596
        %v977 = vpop.f32.mrf.mxu0
        %v978 = vadd.f32 %v658, %v977
        %v979 = vpop.f32.mrf.mxu0
        %v980 = vadd.f32 %v662, %v979
        %v981 = vpop.f32.mrf.mxu0
        %v982 = vadd.f32 %v658, %v981
        %v983 = vpop.f32.mrf.mxu0
        %v984 = vadd.f32 %v662, %v983
        %985 = vdwg.mxu0
        %986 = vmatprep.subr.bf16.mxu0 0
        %987 = vmatpush1.bf16.msra.mxu0 %v839
        %988 = vmatprep.subr.bf16.mxu0 0
        %989 = vmatpush1.bf16.msra.mxu0 %v834
        %990 = vmatprep.subr.bf16.mxu0 0
        %991 = vmatpush1.bf16.msra.mxu0 %v829
        %992 = vmatprep.subr.bf16.mxu0 0
        %993 = vmatpush1.bf16.msra.mxu0 %v824
        %994 = vmatprep.subr.bf16.mxu0 0
        %995 = vmatpush1.bf16.msra.mxu0 %v819
        %996 = vmatprep.subr.bf16.mxu0 0
        %997 = vmatpush1.bf16.msra.mxu0 %v814
        %998 = vmatprep.subr.bf16.mxu0 0
        %999 = vmatpush1.bf16.msra.mxu0 %v809
        %1000 = vmatprep.subr.bf16.mxu0 0
        %1001 = vmatpush1.bf16.msra.mxu0 %v804
        %1002 = vmatprep.subr.bf16.mxu0 0
        %1003 = vmatpush2.bf16.msra.mxu0 0
        %1004 = vmatprep.subr.bf16.mxu0 0
        %1005 = vmatpush2.bf16.msra.mxu0 0
        %1006 = vmatprep.subr.bf16.mxu0 0
        %1007 = vmatpush2.bf16.msra.mxu0 0
        %1008 = vmatprep.subr.bf16.mxu0 0
        %1009 = vmatpush2.bf16.msra.mxu0 0
        %1010 = vmatprep.subr.bf16.mxu0 0
        %1011 = vmatpush2.bf16.msra.mxu0 0
        %1012 = vmatprep.subr.bf16.mxu0 0
        %1013 = vmatpush2.bf16.msra.mxu0 0
        %1014 = vmatprep.subr.bf16.mxu0 0
        %1015 = vmatpush2.bf16.msra.mxu0 0
        %1016 = vmatprep.subr.bf16.mxu0 0
        %1017 = vmatpush2.bf16.msra.mxu0 0
        %1018 = vmatprep.mubr.bf16.mxu0 0
        %1019 = vmatmul.mubr.bf16.gmra.mxu0 %v595
        %v1020 = vpop.f32.mrf.mxu0
        %v1021 = vadd.f32 %v666, %v1020
        %v1022 = vpop.f32.mrf.mxu0
        %v1023 = vpop.f32.mrf.mxu0
        %v1024 = vadd.f32 %v666, %v1023
        %v1025 = vpop.f32.mrf.mxu0
        %1026 = vmatprep.mubr.bf16.mxu0 0
        %1027 = vmatmul.mubr.bf16.gmra.mxu0 %v596
        %v1028 = vpop.f32.mrf.mxu0
        %v1029 = vadd.f32 %v666, %v1028
        %v1030 = vpop.f32.mrf.mxu0
        %v1031 = vpop.f32.mrf.mxu0
        %v1032 = vadd.f32 %v666, %v1031
        %v1033 = vpop.f32.mrf.mxu0
        %1034 = vdwg.mxu0
        %v1035 = vpack.c.bf16 %v564, %v563
        %v1036 = vpack.c.bf16 %v566, %v565
        %v1037 = vpack.c.bf16 %v568, %v567
        %v1038 = vpack.c.bf16 %v570, %v569
        %v1039 = vld [vmem:[%s518] sm:$0xf]
        %v1040 = vld [vmem:[%s518 + $0x4] sm:$0xf]
        %v1041 = vld [vmem:[%s518 + $0x8] sm:$0xf]
        %v1042 = vld [vmem:[%s518 + $0xc] sm:$0xf]
        %v1043 = vld [vmem:[%s518 + $0x10] sm:$0xf]
        %v1044 = vld [vmem:[%s518 + $0x14] sm:$0xf]
        %v1045 = vld [vmem:[%s518 + $0x18] sm:$0xf]
        %v1046 = vld [vmem:[%s518 + $0x1c] sm:$0xf]
        %v1047 = vld [vmem:[%s518 + $0x20] sm:$0xf]
        %v1048 = vld [vmem:[%s518 + $0x24] sm:$0xf]
        %v1049 = vld [vmem:[%s518 + $0x28] sm:$0xf]
        %v1050 = vld [vmem:[%s518 + $0x2c] sm:$0xf]
        %v1051 = vld [vmem:[%s518 + $0x30] sm:$0xf]
        %v1052 = vld [vmem:[%s518 + $0x34] sm:$0xf]
        %v1053 = vld [vmem:[%s518 + $0x38] sm:$0xf]
        %v1054 = vld [vmem:[%s518 + $0x3c] sm:$0xf]
        %v1055 = vld [vmem:[%s521] sm:$0x1]
        %v1057 = vlaneseq
        %v1058 = vshrl.u32 %v1057, 7
        %v1059 = vsub.s32 0, %v1058
        %v1060 = vrot.slane %v1055, %v1059
        %v1078 = vunpack.c.l.b16 %v1039
        %v1079 = vunpack.c.l.b16 %v1040
        %v1080 = vunpack.c.l.b16 %v1041
        %v1081 = vunpack.c.l.b16 %v1042
        %v1082 = vunpack.c.l.b16 %v1043
        %v1083 = vunpack.c.l.b16 %v1044
        %v1084 = vunpack.c.l.b16 %v1045
        %v1085 = vunpack.c.l.b16 %v1046
        %v1086 = vunpack.c.l.b16 %v1047
        %v1087 = vunpack.c.l.b16 %v1048
        %v1088 = vunpack.c.l.b16 %v1049
        %v1089 = vunpack.c.l.b16 %v1050
        %v1090 = vunpack.c.l.b16 %v1051
        %v1091 = vunpack.c.l.b16 %v1052
        %v1092 = vunpack.c.l.b16 %v1053
        %v1093 = vunpack.c.l.b16 %v1054
        %v1094 = vpack.c.b16 %v1079, %v1078
        %v1095 = vpack.c.b16 %v1081, %v1080
        %v1096 = vpack.c.b16 %v1083, %v1082
        %v1097 = vpack.c.b16 %v1085, %v1084
        %v1098 = vpack.c.b16 %v1087, %v1086
        %v1099 = vpack.c.b16 %v1089, %v1088
        %v1100 = vpack.c.b16 %v1091, %v1090
        %v1101 = vpack.c.b16 %v1093, %v1092
        %1110 = vmatprep.subr.bf16.mxu0 0
        %1111 = vmatpush1.bf16.msra.mxu0 %v1101
        %1112 = vmatprep.subr.bf16.mxu0 0
        %1113 = vmatpush1.bf16.msra.mxu0 %v1100
        %1114 = vmatprep.subr.bf16.mxu0 0
        %1115 = vmatpush1.bf16.msra.mxu0 %v1099
        %1116 = vmatprep.subr.bf16.mxu0 0
        %1117 = vmatpush1.bf16.msra.mxu0 %v1098
        %1118 = vmatprep.subr.bf16.mxu0 0
        %1119 = vmatpush1.bf16.msra.mxu0 %v1097
        %1120 = vmatprep.subr.bf16.mxu0 0
        %1121 = vmatpush1.bf16.msra.mxu0 %v1096
        %1122 = vmatprep.subr.bf16.mxu0 0
        %1123 = vmatpush1.bf16.msra.mxu0 %v1095
        %1124 = vmatprep.subr.bf16.mxu0 0
        %1125 = vmatpush1.bf16.msra.mxu0 %v1094
        %1126 = vmatprep.subr.bf16.mxu0 0
        %1127 = vmatpush2.bf16.msra.mxu0 0
        %1128 = vmatprep.subr.bf16.mxu0 0
        %1129 = vmatpush2.bf16.msra.mxu0 0
        %1130 = vmatprep.subr.bf16.mxu0 0
        %1131 = vmatpush2.bf16.msra.mxu0 0
        %1132 = vmatprep.subr.bf16.mxu0 0
        %1133 = vmatpush2.bf16.msra.mxu0 0
        %1134 = vmatprep.subr.bf16.mxu0 0
        %1135 = vmatpush2.bf16.msra.mxu0 0
        %1136 = vmatprep.subr.bf16.mxu0 0
        %1137 = vmatpush2.bf16.msra.mxu0 0
        %1138 = vmatprep.subr.bf16.mxu0 0
        %1139 = vmatpush2.bf16.msra.mxu0 0
        %1140 = vmatprep.subr.bf16.mxu0 0
        %1141 = vmatpush2.bf16.msra.mxu0 0
        %1142 = vmatprep.mubr.bf16.mxu0 0
        %1143 = vmatmul.mubr.bf16.gmra.mxu0 %v1035
        %v1144 = vpop.f32.mrf.mxu0
        %v1145 = vadd.f32 %v1060, %v1144
        %v1146 = vpop.f32.mrf.mxu0
        %v1147 = vpop.f32.mrf.mxu0
        %v1148 = vadd.f32 %v1060, %v1147
        %v1149 = vpop.f32.mrf.mxu0
        %1150 = vmatprep.mubr.bf16.mxu0 0
        %1151 = vmatmul.mubr.bf16.gmra.mxu0 %v1036
        %v1152 = vpop.f32.mrf.mxu0
        %v1153 = vadd.f32 %v1060, %v1152
        %v1154 = vpop.f32.mrf.mxu0
        %v1155 = vpop.f32.mrf.mxu0
        %v1156 = vadd.f32 %v1060, %v1155
        %v1157 = vpop.f32.mrf.mxu0
        %1158 = vmatprep.mubr.bf16.mxu0 0
        %1159 = vmatmul.mubr.bf16.gmra.mxu0 %v1037
        %v1160 = vpop.f32.mrf.mxu0
        %v1161 = vadd.f32 %v1060, %v1160
        %v1162 = vpop.f32.mrf.mxu0
        %v1163 = vpop.f32.mrf.mxu0
        %v1164 = vadd.f32 %v1060, %v1163
        %v1165 = vpop.f32.mrf.mxu0
        %1166 = vmatprep.mubr.bf16.mxu0 0
        %1167 = vmatmul.mubr.bf16.gmra.mxu0 %v1038
        %v1168 = vpop.f32.mrf.mxu0
        %v1169 = vadd.f32 %v1060, %v1168
        %v1170 = vpop.f32.mrf.mxu0
        %v1171 = vpop.f32.mrf.mxu0
        %v1172 = vadd.f32 %v1060, %v1171
        %v1173 = vpop.f32.mrf.mxu0
        %1174 = vdwg.mxu0
        %v1175 = vpack.c.bf16 %v921, %v917
        %v1176 = vpack.c.bf16 %v972, %v968
        %v1177 = vpack.c.bf16 %v931, %v927
        %v1178 = vpack.c.bf16 %v982, %v978
        %v1187 = vunpack.c.l.b16 %v571
        %v1188 = vunpack.c.l.b16 %v572
        %v1189 = vunpack.c.l.b16 %v573
        %v1190 = vunpack.c.l.b16 %v574
        %v1191 = vunpack.c.l.b16 %v575
        %v1192 = vunpack.c.l.b16 %v576
        %v1193 = vunpack.c.l.b16 %v577
        %v1194 = vunpack.c.l.b16 %v578
        %v1195 = vpack.c.b16 %v1188, %v1187
        %v1196 = vpack.c.b16 %v1190, %v1189
        %v1197 = vpack.c.b16 %v1192, %v1191
        %v1198 = vpack.c.b16 %v1194, %v1193
        %vm1199 = vcmask 261120
        %v1201 = vsel %vm1199, %v1195, 0
        %v1204 = vsel %vm1199, %v1196, 0
        %v1207 = vsel %vm1199, %v1197, 0
        %v1210 = vsel %vm1199, %v1198, 0
        %1212 = vmatprep.subr.bf16.mxu0 0
        %1213 = vmatpush1.bf16.msra.mxu0 0
        %1214 = vmatprep.subr.bf16.mxu0 0
        %1215 = vmatpush1.bf16.msra.mxu0 0
        %1216 = vmatprep.subr.bf16.mxu0 0
        %1217 = vmatpush1.bf16.msra.mxu0 0
        %1218 = vmatprep.subr.bf16.mxu0 0
        %1219 = vmatpush1.bf16.msra.mxu0 0
        %1220 = vmatprep.subr.bf16.mxu0 0
        %1221 = vmatpush1.bf16.msra.mxu0 0
        %1222 = vmatprep.subr.bf16.mxu0 0
        %1223 = vmatpush1.bf16.msra.mxu0 0
        %1224 = vmatprep.subr.bf16.mxu0 %v1178
        %1225 = vmatpush1.bf16.msra.mxu0 %v1177
        %1226 = vmatprep.subr.bf16.mxu0 %v1176
        %1227 = vmatpush1.bf16.msra.mxu0 %v1175
        %1228 = vmatprep.subr.bf16.mxu0 0
        %1229 = vmatpush2.bf16.msra.mxu0 0
        %1230 = vmatprep.subr.bf16.mxu0 0
        %1231 = vmatpush2.bf16.msra.mxu0 0
        %1232 = vmatprep.subr.bf16.mxu0 0
        %1233 = vmatpush2.bf16.msra.mxu0 0
        %1234 = vmatprep.subr.bf16.mxu0 0
        %1235 = vmatpush2.bf16.msra.mxu0 0
        %1236 = vmatprep.subr.bf16.mxu0 0
        %1237 = vmatpush2.bf16.msra.mxu0 0
        %1238 = vmatprep.subr.bf16.mxu0 0
        %1239 = vmatpush2.bf16.msra.mxu0 0
        %1240 = vmatprep.subr.bf16.mxu0 0
        %1241 = vmatpush2.bf16.msra.mxu0 0
        %1242 = vmatprep.subr.bf16.mxu0 0
        %1243 = vmatpush2.bf16.msra.mxu0 0
        %1244 = vmatprep.mubr.bf16.mxu0 0
        %1245 = vmatmul.mubr.bf16.gmra.mxu0 %v1201
        %v1246 = vpop.f32.mrf.mxu0
        %v1247 = vadd.f32 0.0, %v1246
        %v1248 = vpop.f32.mrf.mxu0
        %v1249 = vadd.f32 0.0, %v1248
        %v1250 = vpop.f32.mrf.mxu0
        %v1251 = vadd.f32 0.0, %v1250
        %v1252 = vpop.f32.mrf.mxu0
        %v1253 = vadd.f32 0.0, %v1252
        %1254 = vmatprep.mubr.bf16.mxu0 0
        %1255 = vmatmul.mubr.bf16.gmra.mxu0 %v1204
        %v1256 = vpop.f32.mrf.mxu0
        %v1257 = vadd.f32 0.0, %v1256
        %v1258 = vpop.f32.mrf.mxu0
        %v1259 = vadd.f32 0.0, %v1258
        %v1260 = vpop.f32.mrf.mxu0
        %v1261 = vadd.f32 0.0, %v1260
        %v1262 = vpop.f32.mrf.mxu0
        %v1263 = vadd.f32 0.0, %v1262
        %1264 = vmatprep.mubr.bf16.mxu0 0
        %1265 = vmatmul.mubr.bf16.gmra.mxu0 %v1207
        %v1266 = vpop.f32.mrf.mxu0
        %v1267 = vadd.f32 0.0, %v1266
        %v1268 = vpop.f32.mrf.mxu0
        %v1269 = vadd.f32 0.0, %v1268
        %v1270 = vpop.f32.mrf.mxu0
        %v1271 = vadd.f32 0.0, %v1270
        %v1272 = vpop.f32.mrf.mxu0
        %v1273 = vadd.f32 0.0, %v1272
        %1274 = vmatprep.mubr.bf16.mxu0 0
        %1275 = vmatmul.mubr.bf16.gmra.mxu0 %v1210
        %v1276 = vpop.f32.mrf.mxu0
        %v1277 = vadd.f32 0.0, %v1276
        %v1278 = vpop.f32.mrf.mxu0
        %v1279 = vadd.f32 0.0, %v1278
        %v1280 = vpop.f32.mrf.mxu0
        %v1281 = vadd.f32 0.0, %v1280
        %v1282 = vpop.f32.mrf.mxu0
        %v1283 = vadd.f32 0.0, %v1282
        %1284 = vdwg.mxu0
        %v1285 = vpack.c.bf16 %v974, %v970
        %v1286 = vpack.c.bf16 %v1024, %v1021
        %v1287 = vpack.c.bf16 %v984, %v980
        %v1288 = vpack.c.bf16 %v1032, %v1029
        %v1297 = vunpack.c.l.b16 %v579
        %v1298 = vunpack.c.l.b16 %v580
        %v1299 = vunpack.c.l.b16 %v581
        %v1300 = vunpack.c.l.b16 %v582
        %v1301 = vunpack.c.l.b16 %v583
        %v1302 = vunpack.c.l.b16 %v584
        %v1303 = vunpack.c.l.b16 %v585
        %v1304 = vunpack.c.l.b16 %v586
        %v1305 = vpack.c.b16 %v1298, %v1297
        %v1306 = vpack.c.b16 %v1300, %v1299
        %v1307 = vpack.c.b16 %v1302, %v1301
        %v1308 = vpack.c.b16 %v1304, %v1303
        %v1310 = vsel %vm1199, %v1305, 0
        %v1313 = vsel %vm1199, %v1306, 0
        %v1316 = vsel %vm1199, %v1307, 0
        %v1319 = vsel %vm1199, %v1308, 0
        %1321 = vmatprep.subr.bf16.mxu0 0
        %1322 = vmatpush1.bf16.msra.mxu0 0
        %1323 = vmatprep.subr.bf16.mxu0 0
        %1324 = vmatpush1.bf16.msra.mxu0 0
        %1325 = vmatprep.subr.bf16.mxu0 0
        %1326 = vmatpush1.bf16.msra.mxu0 0
        %1327 = vmatprep.subr.bf16.mxu0 0
        %1328 = vmatpush1.bf16.msra.mxu0 0
        %1329 = vmatprep.subr.bf16.mxu0 0
        %1330 = vmatpush1.bf16.msra.mxu0 0
        %1331 = vmatprep.subr.bf16.mxu0 0
        %1332 = vmatpush1.bf16.msra.mxu0 0
        %1333 = vmatprep.subr.bf16.mxu0 %v1288
        %1334 = vmatpush1.bf16.msra.mxu0 %v1287
        %1335 = vmatprep.subr.bf16.mxu0 %v1286
        %1336 = vmatpush1.bf16.msra.mxu0 %v1285
        %1337 = vmatprep.subr.bf16.mxu0 0
        %1338 = vmatpush2.bf16.msra.mxu0 0
        %1339 = vmatprep.subr.bf16.mxu0 0
        %1340 = vmatpush2.bf16.msra.mxu0 0
        %1341 = vmatprep.subr.bf16.mxu0 0
        %1342 = vmatpush2.bf16.msra.mxu0 0
        %1343 = vmatprep.subr.bf16.mxu0 0
        %1344 = vmatpush2.bf16.msra.mxu0 0
        %1345 = vmatprep.subr.bf16.mxu0 0
        %1346 = vmatpush2.bf16.msra.mxu0 0
        %1347 = vmatprep.subr.bf16.mxu0 0
        %1348 = vmatpush2.bf16.msra.mxu0 0
        %1349 = vmatprep.subr.bf16.mxu0 0
        %1350 = vmatpush2.bf16.msra.mxu0 0
        %1351 = vmatprep.subr.bf16.mxu0 0
        %1352 = vmatpush2.bf16.msra.mxu0 0
        %1353 = vmatprep.mubr.bf16.mxu0 0
        %1354 = vmatmul.mubr.bf16.gmra.mxu0 %v1310
        %v1355 = vpop.f32.mrf.mxu0
        %v1356 = vadd.f32 0.0, %v1355
        %v1357 = vpop.f32.mrf.mxu0
        %v1358 = vadd.f32 0.0, %v1357
        %v1359 = vpop.f32.mrf.mxu0
        %v1360 = vadd.f32 0.0, %v1359
        %v1361 = vpop.f32.mrf.mxu0
        %v1362 = vadd.f32 0.0, %v1361
        %1363 = vmatprep.mubr.bf16.mxu0 0
        %1364 = vmatmul.mubr.bf16.gmra.mxu0 %v1313
        %v1365 = vpop.f32.mrf.mxu0
        %v1366 = vadd.f32 0.0, %v1365
        %v1367 = vpop.f32.mrf.mxu0
        %v1368 = vadd.f32 0.0, %v1367
        %v1369 = vpop.f32.mrf.mxu0
        %v1370 = vadd.f32 0.0, %v1369
        %v1371 = vpop.f32.mrf.mxu0
        %v1372 = vadd.f32 0.0, %v1371
        %1373 = vmatprep.mubr.bf16.mxu0 0
        %1374 = vmatmul.mubr.bf16.gmra.mxu0 %v1316
        %v1375 = vpop.f32.mrf.mxu0
        %v1376 = vadd.f32 0.0, %v1375
        %v1377 = vpop.f32.mrf.mxu0
        %v1378 = vadd.f32 0.0, %v1377
        %v1379 = vpop.f32.mrf.mxu0
        %v1380 = vadd.f32 0.0, %v1379
        %v1381 = vpop.f32.mrf.mxu0
        %v1382 = vadd.f32 0.0, %v1381
        %1383 = vmatprep.mubr.bf16.mxu0 0
        %1384 = vmatmul.mubr.bf16.gmra.mxu0 %v1319
        %v1385 = vpop.f32.mrf.mxu0
        %v1386 = vadd.f32 0.0, %v1385
        %v1387 = vpop.f32.mrf.mxu0
        %v1388 = vadd.f32 0.0, %v1387
        %v1389 = vpop.f32.mrf.mxu0
        %v1390 = vadd.f32 0.0, %v1389
        %v1391 = vpop.f32.mrf.mxu0
        %v1392 = vadd.f32 0.0, %v1391
        %1393 = vdwg.mxu0
        %v1394 = vadd.f32 %v1145, %v1249
        %v1395 = vadd.f32 %v1148, %v1253
        %v1396 = vadd.f32 %v1153, %v1259
        %v1397 = vadd.f32 %v1156, %v1263
        %v1398 = vadd.f32 %v1161, %v1269
        %v1399 = vadd.f32 %v1164, %v1273
        %v1400 = vadd.f32 %v1169, %v1279
        %v1401 = vadd.f32 %v1172, %v1283
        %v1402 = vadd.f32 %v1394, %v1358
        %v1403 = vadd.f32 %v1395, %v1362
        %v1404 = vadd.f32 %v1396, %v1368
        %v1405 = vadd.f32 %v1397, %v1372
        %v1406 = vadd.f32 %v1398, %v1378
        %v1407 = vadd.f32 %v1399, %v1382
        %v1408 = vadd.f32 %v1400, %v1388
        %v1409 = vadd.f32 %v1401, %v1392
        %v1410 = vxor.u32 %v1402, 2147483648
        %v1411 = vxor.u32 %v1403, 2147483648
        %v1412 = vxor.u32 %v1404, 2147483648
        %v1413 = vxor.u32 %v1405, 2147483648
        %v1414 = vxor.u32 %v1406, 2147483648
        %v1415 = vxor.u32 %v1407, 2147483648
        %v1416 = vxor.u32 %v1408, 2147483648
        %v1417 = vxor.u32 %v1409, 2147483648
        %v1418 = vmul.f32 %v1410, 1.442695
        %v1419 = vpow.pop %v1418
        %v1420 = vmul.f32 %v1411, 1.442695
        %v1421 = vpow.pop %v1420
        %v1422 = vmul.f32 %v1412, 1.442695
        %v1423 = vpow.pop %v1422
        %v1424 = vmul.f32 %v1413, 1.442695
        %v1425 = vpow.pop %v1424
        %v1426 = vmul.f32 %v1414, 1.442695
        %v1427 = vpow.pop %v1426
        %v1428 = vmul.f32 %v1415, 1.442695
        %v1429 = vpow.pop %v1428
        %v1430 = vmul.f32 %v1416, 1.442695
        %v1431 = vpow.pop %v1430
        %v1432 = vmul.f32 %v1417, 1.442695
        %v1433 = vpow.pop %v1432
        %v1434 = vadd.f32 %v1419, 1.0
        %v1435 = vadd.f32 %v1421, 1.0
        %v1436 = vadd.f32 %v1423, 1.0
        %v1437 = vadd.f32 %v1425, 1.0
        %v1438 = vadd.f32 %v1427, 1.0
        %v1439 = vadd.f32 %v1429, 1.0
        %v1440 = vadd.f32 %v1431, 1.0
        %v1441 = vadd.f32 %v1433, 1.0
        %v1442 = vrcp.pop %v1434
        %v1443 = vmul.f32 1.0, %v1442
        %v1444 = vrcp.pop %v1435
        %v1445 = vmul.f32 1.0, %v1444
        %v1446 = vrcp.pop %v1436
        %v1447 = vmul.f32 1.0, %v1446
        %v1448 = vrcp.pop %v1437
        %v1449 = vmul.f32 1.0, %v1448
        %v1450 = vrcp.pop %v1438
        %v1451 = vmul.f32 1.0, %v1450
        %v1452 = vrcp.pop %v1439
        %v1453 = vmul.f32 1.0, %v1452
        %v1454 = vrcp.pop %v1440
        %v1455 = vmul.f32 1.0, %v1454
        %v1456 = vrcp.pop %v1441
        %v1457 = vmul.f32 1.0, %v1456
        %v1458 = vmul.f32 %v1443, %v1247
        %v1459 = vmul.f32 %v1445, %v1251
        %v1460 = vmul.f32 %v1447, %v1257
        %v1461 = vmul.f32 %v1449, %v1261
        %v1462 = vmul.f32 %v1451, %v1267
        %v1463 = vmul.f32 %v1453, %v1271
        %v1464 = vmul.f32 %v1455, %v1277
        %v1465 = vmul.f32 %v1457, %v1281
        %v1466 = vpack.c.bf16 %v1459, %v1458
        %v1467 = vpack.c.bf16 %v1445, %v1443
        %v1468 = vpack.c.bf16 %v1461, %v1460
        %v1469 = vpack.c.bf16 %v1449, %v1447
        %v1470 = vpack.c.bf16 %v1463, %v1462
        %v1471 = vpack.c.bf16 %v1453, %v1451
        %v1472 = vpack.c.bf16 %v1465, %v1464
        %v1473 = vpack.c.bf16 %v1457, %v1455
        %v1474 = vmul.f32 %v1443, %v1356
        %v1475 = vmul.f32 %v1445, %v1360
        %v1476 = vmul.f32 %v1447, %v1366
        %v1477 = vmul.f32 %v1449, %v1370
        %v1478 = vmul.f32 %v1451, %v1376
        %v1479 = vmul.f32 %v1453, %v1380
        %v1480 = vmul.f32 %v1455, %v1386
        %v1481 = vmul.f32 %v1457, %v1390
        %v1482 = vpack.c.bf16 %v1475, %v1474
        %v1483 = vpack.c.bf16 %v1477, %v1476
        %v1484 = vpack.c.bf16 %v1479, %v1478
        %v1485 = vpack.c.bf16 %v1481, %v1480
        %v1490 = vunpack.c.l.b16 %v591
        %v1491 = vunpack.c.l.b16 %v592
        %v1492 = vunpack.c.l.b16 %v593
        %v1493 = vunpack.c.l.b16 %v594
        %v1494 = vpack.c.b16 %v1491, %v1490
        %v1495 = vpack.c.b16 %v1493, %v1492
        %vm1496 = vcmask 523264
        %v1498 = vsel %vm1496, %v1494, 0
        %v1501 = vsel %vm1496, %v1495, 0
        %1503 = vmatprep.subr.bf16.mxu0 0
        %1504 = vmatpush1.bf16.msra.mxu0 0
        %1505 = vmatprep.subr.bf16.mxu0 0
        %1506 = vmatpush1.bf16.msra.mxu0 0
        %1507 = vmatprep.subr.bf16.mxu0 0
        %1508 = vmatpush1.bf16.msra.mxu0 0
        %1509 = vmatprep.subr.bf16.mxu0 0
        %1510 = vmatpush1.bf16.msra.mxu0 0
        %1511 = vmatprep.subr.bf16.mxu0 %v1473
        %1512 = vmatpush1.bf16.msra.mxu0 %v1472
        %1513 = vmatprep.subr.bf16.mxu0 %v1471
        %1514 = vmatpush1.bf16.msra.mxu0 %v1470
        %1515 = vmatprep.subr.bf16.mxu0 %v1469
        %1516 = vmatpush1.bf16.msra.mxu0 %v1468
        %1517 = vmatprep.subr.bf16.mxu0 %v1467
        %1518 = vmatpush1.bf16.msra.mxu0 %v1466
        %1519 = vmatprep.subr.bf16.mxu0 0
        %1520 = vmatpush2.bf16.msra.mxu0 0
        %1521 = vmatprep.subr.bf16.mxu0 0
        %1522 = vmatpush2.bf16.msra.mxu0 0
        %1523 = vmatprep.subr.bf16.mxu0 0
        %1524 = vmatpush2.bf16.msra.mxu0 0
        %1525 = vmatprep.subr.bf16.mxu0 0
        %1526 = vmatpush2.bf16.msra.mxu0 0
        %1527 = vmatprep.subr.bf16.mxu0 0
        %1528 = vmatpush2.bf16.msra.mxu0 0
        %1529 = vmatprep.subr.bf16.mxu0 0
        %1530 = vmatpush2.bf16.msra.mxu0 0
        %1531 = vmatprep.subr.bf16.mxu0 0
        %1532 = vmatpush2.bf16.msra.mxu0 0
        %1533 = vmatprep.subr.bf16.mxu0 0
        %1534 = vmatpush2.bf16.msra.mxu0 0
        %1535 = vmatprep.mubr.bf16.mxu0 0
        %1536 = vmatmul.mubr.bf16.gmra.mxu0 %v1498
        %v1537 = vpop.f32.mrf.mxu0
        %v1538 = vadd.f32 0.0, %v1537
        %v1539 = vpop.f32.mrf.mxu0
        %v1540 = vadd.f32 0.0, %v1539
        %v1541 = vpop.f32.mrf.mxu0
        %v1542 = vadd.f32 0.0, %v1541
        %v1543 = vpop.f32.mrf.mxu0
        %v1544 = vadd.f32 0.0, %v1543
        %1545 = vmatprep.mubr.bf16.mxu0 0
        %1546 = vmatmul.mubr.bf16.gmra.mxu0 %v1501
        %v1547 = vpop.f32.mrf.mxu0
        %v1548 = vadd.f32 0.0, %v1547
        %v1549 = vpop.f32.mrf.mxu0
        %v1550 = vadd.f32 0.0, %v1549
        %v1551 = vpop.f32.mrf.mxu0
        %v1552 = vadd.f32 0.0, %v1551
        %v1553 = vpop.f32.mrf.mxu0
        %v1554 = vadd.f32 0.0, %v1553
        %1555 = vdwg.mxu0
        %v1560 = vunpack.c.l.b16 %v587
        %v1561 = vunpack.c.l.b16 %v588
        %v1562 = vunpack.c.l.b16 %v589
        %v1563 = vunpack.c.l.b16 %v590
        %v1564 = vpack.c.b16 %v1561, %v1560
        %v1565 = vpack.c.b16 %v1563, %v1562
        %v1567 = vsel %vm1496, %v1564, 0
        %v1570 = vsel %vm1496, %v1565, 0
        %1572 = vmatprep.subr.bf16.mxu0 0
        %1573 = vmatpush1.bf16.msra.mxu0 0
        %1574 = vmatprep.subr.bf16.mxu0 0
        %1575 = vmatpush1.bf16.msra.mxu0 0
        %1576 = vmatprep.subr.bf16.mxu0 0
        %1577 = vmatpush1.bf16.msra.mxu0 0
        %1578 = vmatprep.subr.bf16.mxu0 0
        %1579 = vmatpush1.bf16.msra.mxu0 0
        %1580 = vmatprep.subr.bf16.mxu0 %v1473
        %1581 = vmatpush1.bf16.msra.mxu0 %v1485
        %1582 = vmatprep.subr.bf16.mxu0 %v1471
        %1583 = vmatpush1.bf16.msra.mxu0 %v1484
        %1584 = vmatprep.subr.bf16.mxu0 %v1469
        %1585 = vmatpush1.bf16.msra.mxu0 %v1483
        %1586 = vmatprep.subr.bf16.mxu0 %v1467
        %1587 = vmatpush1.bf16.msra.mxu0 %v1482
        %1588 = vmatprep.subr.bf16.mxu0 0
        %1589 = vmatpush2.bf16.msra.mxu0 0
        %1590 = vmatprep.subr.bf16.mxu0 0
        %1591 = vmatpush2.bf16.msra.mxu0 0
        %1592 = vmatprep.subr.bf16.mxu0 0
        %1593 = vmatpush2.bf16.msra.mxu0 0
        %1594 = vmatprep.subr.bf16.mxu0 0
        %1595 = vmatpush2.bf16.msra.mxu0 0
        %1596 = vmatprep.subr.bf16.mxu0 0
        %1597 = vmatpush2.bf16.msra.mxu0 0
        %1598 = vmatprep.subr.bf16.mxu0 0
        %1599 = vmatpush2.bf16.msra.mxu0 0
        %1600 = vmatprep.subr.bf16.mxu0 0
        %1601 = vmatpush2.bf16.msra.mxu0 0
        %1602 = vmatprep.subr.bf16.mxu0 0
        %1603 = vmatpush2.bf16.msra.mxu0 0
        %1604 = vmatprep.mubr.bf16.mxu0 0
        %1605 = vmatmul.mubr.bf16.gmra.mxu0 %v1567
        %v1606 = vpop.f32.mrf.mxu0
        %v1607 = vadd.f32 0.0, %v1606
        %v1608 = vpop.f32.mrf.mxu0
        %v1609 = vadd.f32 0.0, %v1608
        %v1610 = vpop.f32.mrf.mxu0
        %v1611 = vadd.f32 0.0, %v1610
        %v1612 = vpop.f32.mrf.mxu0
        %v1613 = vadd.f32 0.0, %v1612
        %1614 = vmatprep.mubr.bf16.mxu0 0
        %1615 = vmatmul.mubr.bf16.gmra.mxu0 %v1570
        %v1616 = vpop.f32.mrf.mxu0
        %v1617 = vadd.f32 0.0, %v1616
        %v1618 = vpop.f32.mrf.mxu0
        %v1619 = vadd.f32 0.0, %v1618
        %v1620 = vpop.f32.mrf.mxu0
        %v1621 = vadd.f32 0.0, %v1620
        %v1622 = vpop.f32.mrf.mxu0
        %v1623 = vadd.f32 0.0, %v1622
        %1624 = vdwg.mxu0
        %v1625 = vadd.f32 %v1540, 1e-06
        %v1626 = vadd.f32 %v1544, 1e-06
        %v1627 = vadd.f32 %v1550, 1e-06
        %v1628 = vadd.f32 %v1554, 1e-06
        %v1629 = vrcp.pop %v1625
        %v1630 = vmul.f32 %v1538, %v1629
        %v1631 = vrcp.pop %v1626
        %v1632 = vmul.f32 %v1542, %v1631
        %v1633 = vrcp.pop %v1627
        %v1634 = vmul.f32 %v1548, %v1633
        %v1635 = vrcp.pop %v1628
        %v1636 = vmul.f32 %v1552, %v1635
        %v1637 = vadd.f32 %v1609, 1e-06
        %v1638 = vadd.f32 %v1613, 1e-06
        %v1639 = vadd.f32 %v1619, 1e-06
        %v1640 = vadd.f32 %v1623, 1e-06
        %v1641 = vrcp.pop %v1637
        %v1642 = vmul.f32 %v1607, %v1641
        %v1643 = vrcp.pop %v1638
        %v1644 = vmul.f32 %v1611, %v1643
        %v1645 = vrcp.pop %v1639
        %v1646 = vmul.f32 %v1617, %v1645
        %v1647 = vrcp.pop %v1640
        %v1648 = vmul.f32 %v1621, %v1647
        %v1649 = vadd.f32 %v915, %v1630
        %v1650 = vadd.f32 %v919, %v1632
        %v1651 = vadd.f32 %v925, %v1634
        %v1652 = vadd.f32 %v929, %v1636
        %v1653 = vadd.f32 %v1649, %v1642
        %v1654 = vadd.f32 %v1650, %v1644
        %v1655 = vadd.f32 %v1651, %v1646
        %v1656 = vadd.f32 %v1652, %v1648
        %v1657 = vld [vmem:[%s525] sm:$0x3]
        %v1658 = vadd.f32 %v1653, %v1654
        %v1659 = vadd.f32 %v1658, %v1655
        %v1660 = vadd.f32 %v1659, %v1656
        %v1661 = vrot.slane %v1660, 4
        %v1662 = vadd.f32 %v1660, %v1661
        %v1663 = vrot.slane %v1662, 2
        %v1664 = vadd.f32 %v1662, %v1663
        %v1665 = vrot.slane %v1664, 1
        %v1666 = vadd.f32 %v1664, %v1665
        %v1667 = vrcp.pop 32.0
        %v1668 = vmul.f32 %v1666, %v1667
        %v1669 = vsub.f32 %v1653, %v1668
        %v1670 = vsub.f32 %v1654, %v1668
        %v1671 = vsub.f32 %v1655, %v1668
        %v1672 = vsub.f32 %v1656, %v1668
        %v1673 = vmul.f32 %v1669, %v1669
        %v1674 = vmul.f32 %v1670, %v1670
        %v1675 = vmul.f32 %v1671, %v1671
        %v1676 = vmul.f32 %v1672, %v1672
        %v1677 = vadd.f32 %v1673, %v1674
        %v1678 = vadd.f32 %v1677, %v1675
        %v1679 = vadd.f32 %v1678, %v1676
        %v1680 = vrot.slane %v1679, 4
        %v1681 = vadd.f32 %v1679, %v1680
        %v1682 = vrot.slane %v1681, 2
        %v1683 = vadd.f32 %v1681, %v1682
        %v1684 = vrot.slane %v1683, 1
        %v1685 = vadd.f32 %v1683, %v1684
        %v1686 = vmul.f32 %v1685, %v1667
        %v1687 = vadd.f32 %v1686, 1e-05
        %v1688 = vrsqrt.pop %v1687
        %v1689 = vmul.f32 %v1669, %v1688
        %v1690 = vmul.f32 %v1670, %v1688
        %v1691 = vmul.f32 %v1671, %v1688
        %v1692 = vmul.f32 %v1672, %v1688
        %v1693 = vlaneseq
        %v1694 = vshrl.u32 %v1693, 7
        %v1695 = vsub.s32 0, %v1694
        %v1696 = vrot.slane %v1657, %v1695
        %v1697 = vmul.f32 %v1689, %v1696
        %v1698 = vmul.f32 %v1690, %v1696
        %v1699 = vmul.f32 %v1691, %v1696
        %v1700 = vmul.f32 %v1692, %v1696
        %v1701 = vlaneseq
        %v1702 = vshrl.u32 %v1701, 7
        %v1703 = vsub.s32 1, %v1702
        %v1704 = vrot.slane %v1657, %v1703
        %v1705 = vadd.f32 %v1697, %v1704
        %v1706 = vadd.f32 %v1698, %v1704
        %v1707 = vadd.f32 %v1699, %v1704
        %v1708 = vadd.f32 %v1700, %v1704
        %v1709 = vmax.f32 %v1705, 0.0
        %v1710 = vmax.f32 %v1706, 0.0
        %v1711 = vmax.f32 %v1707, 0.0
        %v1712 = vmax.f32 %v1708, 0.0
        %v1713 = vld [vmem:[%s529] sm:$0x3]
        %v1714 = vadd.f32 %v1402, %v1403
        %v1715 = vadd.f32 %v1714, %v1404
        %v1716 = vadd.f32 %v1715, %v1405
        %v1717 = vadd.f32 %v1716, %v1406
        %v1718 = vadd.f32 %v1717, %v1407
        %v1719 = vadd.f32 %v1718, %v1408
        %v1720 = vadd.f32 %v1719, %v1409
        %v1721 = vrot.slane %v1720, 4
        %v1722 = vadd.f32 %v1720, %v1721
        %v1723 = vrot.slane %v1722, 2
        %v1724 = vadd.f32 %v1722, %v1723
        %v1725 = vrot.slane %v1724, 1
        %v1726 = vadd.f32 %v1724, %v1725
        %v1727 = vrcp.pop 64.0
        %v1728 = vmul.f32 %v1726, %v1727
        %v1729 = vsub.f32 %v1402, %v1728
        %v1730 = vsub.f32 %v1403, %v1728
        %v1731 = vsub.f32 %v1404, %v1728
        %v1732 = vsub.f32 %v1405, %v1728
        %v1733 = vsub.f32 %v1406, %v1728
        %v1734 = vsub.f32 %v1407, %v1728
        %v1735 = vsub.f32 %v1408, %v1728
        %v1736 = vsub.f32 %v1409, %v1728
        %v1737 = vmul.f32 %v1729, %v1729
        %v1738 = vmul.f32 %v1730, %v1730
        %v1739 = vmul.f32 %v1731, %v1731
        %v1740 = vmul.f32 %v1732, %v1732
        %v1741 = vmul.f32 %v1733, %v1733
        %v1742 = vmul.f32 %v1734, %v1734
        %v1743 = vmul.f32 %v1735, %v1735
        %v1744 = vmul.f32 %v1736, %v1736
        %v1745 = vadd.f32 %v1737, %v1738
        %v1746 = vadd.f32 %v1745, %v1739
        %v1747 = vadd.f32 %v1746, %v1740
        %v1748 = vadd.f32 %v1747, %v1741
        %v1749 = vadd.f32 %v1748, %v1742
        %v1750 = vadd.f32 %v1749, %v1743
        %v1751 = vadd.f32 %v1750, %v1744
        %v1752 = vrot.slane %v1751, 4
        %v1753 = vadd.f32 %v1751, %v1752
        %v1754 = vrot.slane %v1753, 2
        %v1755 = vadd.f32 %v1753, %v1754
        %v1756 = vrot.slane %v1755, 1
        %v1757 = vadd.f32 %v1755, %v1756
        %v1758 = vmul.f32 %v1757, %v1727
        %v1759 = vadd.f32 %v1758, 1e-05
        %v1760 = vrsqrt.pop %v1759
        %v1761 = vmul.f32 %v1729, %v1760
        %v1762 = vmul.f32 %v1730, %v1760
        %v1763 = vmul.f32 %v1731, %v1760
        %v1764 = vmul.f32 %v1732, %v1760
        %v1765 = vmul.f32 %v1733, %v1760
        %v1766 = vmul.f32 %v1734, %v1760
        %v1767 = vmul.f32 %v1735, %v1760
        %v1768 = vmul.f32 %v1736, %v1760
        %v1769 = vlaneseq
        %v1770 = vshrl.u32 %v1769, 7
        %v1771 = vsub.s32 0, %v1770
        %v1772 = vrot.slane %v1713, %v1771
        %v1773 = vmul.f32 %v1761, %v1772
        %v1774 = vmul.f32 %v1762, %v1772
        %v1775 = vmul.f32 %v1763, %v1772
        %v1776 = vmul.f32 %v1764, %v1772
        %v1777 = vmul.f32 %v1765, %v1772
        %v1778 = vmul.f32 %v1766, %v1772
        %v1779 = vmul.f32 %v1767, %v1772
        %v1780 = vmul.f32 %v1768, %v1772
        %v1781 = vlaneseq
        %v1782 = vshrl.u32 %v1781, 7
        %v1783 = vsub.s32 1, %v1782
        %v1784 = vrot.slane %v1713, %v1783
        %v1785 = vadd.f32 %v1773, %v1784
        %v1786 = vadd.f32 %v1774, %v1784
        %v1787 = vadd.f32 %v1775, %v1784
        %v1788 = vadd.f32 %v1776, %v1784
        %v1789 = vadd.f32 %v1777, %v1784
        %v1790 = vadd.f32 %v1778, %v1784
        %v1791 = vadd.f32 %v1779, %v1784
        %v1792 = vadd.f32 %v1780, %v1784
        %v1793 = vmax.f32 %v1785, 0.0
        %v1794 = vmax.f32 %v1786, 0.0
        %v1795 = vmax.f32 %v1787, 0.0
        %v1796 = vmax.f32 %v1788, 0.0
        %v1797 = vmax.f32 %v1789, 0.0
        %v1798 = vmax.f32 %v1790, 0.0
        %v1799 = vmax.f32 %v1791, 0.0
        %v1800 = vmax.f32 %v1792, 0.0
        %v1801 = vadd.f32 %v559, %v1709
        %v1802 = vadd.f32 %v560, %v1710
        %v1803 = vadd.f32 %v561, %v1711
        %v1804 = vadd.f32 %v562, %v1712
        %1805 = vst [vmem:[#allocation5] sm:$0xff] %v1801
        %1806 = vst [vmem:[#allocation5 + $0x8] sm:$0xff] %v1802
        %1807 = vst [vmem:[#allocation5 + $0x10] sm:$0xff] %v1803
        %1808 = vst [vmem:[#allocation5 + $0x18] sm:$0xff] %v1804
        %v1809 = vadd.f32 %v563, %v1793
        %v1810 = vadd.f32 %v564, %v1794
        %v1811 = vadd.f32 %v565, %v1795
        %v1812 = vadd.f32 %v566, %v1796
        %v1813 = vadd.f32 %v567, %v1797
        %v1814 = vadd.f32 %v568, %v1798
        %v1815 = vadd.f32 %v569, %v1799
        %v1816 = vadd.f32 %v570, %v1800
        %1817 = vst [vmem:[%s13] sm:$0xff] %v1809
        %1818 = vst [vmem:[%s13 + $0x8] sm:$0xff] %v1810
        %1819 = vst [vmem:[%s13 + $0x10] sm:$0xff] %v1811
        %1820 = vst [vmem:[%s13 + $0x18] sm:$0xff] %v1812
        %1821 = vst [vmem:[%s13 + $0x20] sm:$0xff] %v1813
        %1822 = vst [vmem:[%s13 + $0x28] sm:$0xff] %v1814
        %1823 = vst [vmem:[%s13 + $0x30] sm:$0xff] %v1815
        %1824 = vst [vmem:[%s13 + $0x38] sm:$0xff] %v1816
        // Predicated region
        $region77: #{sym_gated_gcn_processor.1} parent=67 // pred_check
          %p1825 = pneg %p324
        $region78: #{sym_gated_gcn_processor.1} parent=67 // pred_check_branch
          %1827 = sbr.rel (%p1825) target = $region80
        $region79: #{sym_gated_gcn_processor.1} parent=67 // pred_region
          %s1829 = ssub.s32 512, 512
          %1830 = vsyncadd [#allocation4], %s1829
          %s1831 = sshll.u32 [#allocation5], 4
          %s1832 = int_to_ptr.vmem [resolvable:$true] %s1831
          %1837 = dma.vmem_to_hbm [thread:$0]  %s1832, 512, %s12, [#allocation4], 128, 128, 8
        $region80: #{sym_gated_gcn_processor.1} parent=67 // pred_fallthru
          _
        // Predicated region
        $region81: #{sym_gated_gcn_processor.1} parent=67 // pred_check
          %p1838 = pneg %p345
        $region82: #{sym_gated_gcn_processor.1} parent=67 // pred_check_branch
          %1840 = sbr.rel (%p1838) target = $region84
        $region83: #{sym_gated_gcn_processor.1} parent=67 // pred_region
          _
        $region84: #{sym_gated_gcn_processor.1} parent=67 // pred_fallthru
          _
        // Predicated region
        $region85: #{sym_gated_gcn_processor.1} parent=67 // pred_check
          %p1841 = pneg %p324
        $region86: #{sym_gated_gcn_processor.1} parent=67 // pred_check_branch
          %1843 = sbr.rel (%p1841) target = $region88
        $region87: #{sym_gated_gcn_processor.1} parent=67 // pred_region
          %1844 = dma.done [#allocation4], 512
        $region88: #{sym_gated_gcn_processor.1} parent=67 // pred_fallthru
          _
        // Predicated region
        $region89: #{sym_gated_gcn_processor.1} parent=67 // pred_check
          %p1845 = pneg %p345
        $region90: #{sym_gated_gcn_processor.1} parent=67 // pred_check_branch
          %1847 = sbr.rel (%p1845) target = $region92
        $region91: #{sym_gated_gcn_processor.1} parent=67 // pred_region
          _
        $region92: #{sym_gated_gcn_processor.1} parent=67 // pred_fallthru
          _
      $region68: #{sym_gated_gcn_processor.1} parent=5 // pred_fallthru
        _
      %p1848 = scmp.le.s32.totalorder 2, %s24
      // Predicated region
      $region93: #{sym_gated_gcn_processor.1} parent=5 // pred_check
        %p1849 = pneg %p1848
      $region94: #{sym_gated_gcn_processor.1} parent=5 // pred_check_branch
        %1851 = sbr.rel (%p1849) target = $region96
      $region95: #{sym_gated_gcn_processor.1} parent=5 // pred_region
        %s1852 = ssub.s32 %s24, 2
      $region96: #{sym_gated_gcn_processor.1} parent=5 // pred_fallthru
        _
    $region6: #{sym_gated_gcn_processor.1} parent=1 // loop_footer
      %s28 = sadd.s32 1, %s24
    $region7: #{sym_gated_gcn_processor.1} parent=1 // loop_footer_branch
      %23 = sbr.rel target = $region3
    $region8: #{sym_gated_gcn_processor.1} parent=1 // loop_exit
      _
    %1853 = vsyncpa [#allocation3], 1
    %s1854 = scalar_lea.sflag [#allocation3], 1
    %1855 = vsyncpa %s1854, 1
    %1856 = vsyncpa [#allocation4], 1
    %s1857 = scalar_lea.sflag [#allocation4], 1
    %1858 = vsyncpa %s1857, 1

</llo_original>
